<compile_context>
chip_gen: v6e
topology: v6e:2x2x1
jax: 0.10.0
libtpu: 0.0.40
codegen_flags: <defaults>
</compile_context>

<pallas_src>
import functools

import jax
import jax.numpy as jnp
import numpy as np
from jax.experimental import pallas as pl
from jax.experimental.pallas import tpu as pltpu


def _round_up(x, m):
    return (x + m - 1) // m * m


def _pick_tile(dim, max_tile):
    """Largest multiple of 128 that divides `dim` (a multiple of 128) and is <= max_tile."""
    t = max(128, min(max_tile, dim) // 128 * 128)
    while dim % t != 0:
        t -= 128
    return t


def _make_fp8_gemm_bias_kernel(n_k_sub, n_n_sub, kb_total):
    """Builds the kernel for one (tm, tn) output tile accumulated over the K grid axis.

    ws_ref : (NB*KB,) f32 in SMEM -- flattened per-128x128-block weight scales (prefetched)
    x_ref  : (tm, tk) bf16        -- fp8-e4m3-quantized activations held exactly in bf16
    w_ref  : (tk, tn) f8e4m3      -- fp8 weights, pre-transposed to (K, N)
    b_ref  : (1,  tn) bf16        -- bias
    o_ref  : (tm, tn) bf16
    acc_ref: (tm, tn) f32         -- VMEM accumulator, persistent across the K axis
    """

    def kernel(ws_ref, x_ref, w_ref, b_ref, o_ref, acc_ref):
        j = pl.program_id(1)
        k = pl.program_id(2)

        @pl.when(k == 0)
        def _():
            acc_ref[...] = jnp.zeros_like(acc_ref)

        # Static unrolled loop over 128-deep sub-slices (scale blocks are 128x128).
        for sk in range(n_k_sub):
            kb = k * n_k_sub + sk
            x_sub = x_ref[:, sk * 128:(sk + 1) * 128]                       # (tm, 128) bf16
            w_sub = w_ref[sk * 128:(sk + 1) * 128, :].astype(jnp.bfloat16)  # fp8 -> bf16 (VPU)
            partial = jnp.dot(x_sub, w_sub, preferred_element_type=jnp.float32)
            # Per-128-column weight scale, broadcast as a (1, tn) row from SMEM scalars.
            scale_row = jnp.concatenate(
                [jnp.full((1, 128),
                          ws_ref[(j * n_n_sub + sn) * kb_total + kb],
                          dtype=jnp.float32)
                 for sn in range(n_n_sub)],
                axis=1)
            acc_ref[...] += scale_row * partial

        @pl.when(k == pl.num_programs(2) - 1)
        def _():
            # DeepGEMM emits bf16; the torch module adds the bias in bf16.
            o_ref[...] = acc_ref[...].astype(jnp.bfloat16) + b_ref[...]

    return kernel


def prepare_deepgemm_params(weight, weight_scale, bias):
    """One-time parameter preprocessing (outside the training/inference step).

    - fp8-e4m3 quantization of the weight, stored as fp8 in HBM (halves weight bytes),
    - transpose to (Kp, Np) so the kernel RHS block is (tk, tn) and lane-dense,
    - pad the out-feature axis to a multiple of 128,
    - flatten the block scales to 1D for SMEM scalar prefetch.
    """
    Np0, Kp = weight.shape                     # (out_features_padded, in_features_padded)
    Np = _round_up(Np0, 128)

    w_pad = jnp.pad(weight.astype(jnp.float32), ((0, Np - Np0), (0, 0)))   # (Np, Kp)
    w_t = w_pad.T.astype(jnp.float8_e4m3fn)                                # (Kp, Np) fp8

    bias2d = jnp.pad(bias.astype(jnp.bfloat16).reshape(1, -1), ((0, 0), (0, Np - Np0)))

    # weight_scale: (ceil(Np0/128), Kp//128) == (Np//128, Kp//128); flatten row-major.
    ws_flat = weight_scale.astype(jnp.float32).reshape(-1)
    return w_t, ws_flat, bias2d


@functools.partial(jax.jit, static_argnums=(4, 5))
def deepgemm_linear(x, w_t, ws_flat, bias2d, in_features, out_features):
    """JAX wrapper reproducing DeepGEMM_Linear.forward semantics."""
    M = x.shape[0]
    Kp, Np = w_t.shape
    KB = Kp // 128                              # number of 128-wide K scale blocks

    # --- activations: fp8 round-trip (exact in bf16) + padding, in one fused pass ---
    if x.shape[1] != Kp:
        x = x[:, :in_features]
    xq = x.astype(jnp.float8_e4m3fn).astype(jnp.bfloat16)

    # --- tile selection ---
    tm = min(256, _round_up(M, 16))
    Mp = _round_up(M, tm)
    tk = _pick_tile(Kp, 512)
    tn = _pick_tile(Np, 512)
    # Keep >= 2 blocks on a parallel grid axis so both v7x TensorCores get work.
    if Mp // tm == 1 and Np // tn < 2 and Np > 128:
        tn = _pick_tile(Np, Np // 2)

    n_k_sub = tk // 128
    n_n_sub = tn // 128

    xq = jnp.pad(xq, ((0, Mp - M), (0, Kp - xq.shape[1])))

    grid = (Mp // tm, Np // tn, Kp // tk)
    kernel = _make_fp8_gemm_bias_kernel(n_k_sub, n_n_sub, KB)

    # Advisory cost estimate, counting grid revisits of x (per N tile) and w (per M tile).
    cost = pl.CostEstimate(
        flops=2 * Mp * Np * Kp,
        transcendentals=0,
        bytes_accessed=(Mp * Kp * 2) * (Np // tn)     # bf16 activations, re-read per N tile
        + (Kp * Np * 1) * (Mp // tm)                  # fp8 weights, re-read per M tile
        + Mp * Np * 2                                 # bf16 output
        + Np * 2 * (Mp // tm),                        # bf16 bias
    )

    # Explicit VMEM budget: double-buffered blocks + f32 accumulator + headroom.
    blk_bytes = 2 * (tm * tk * 2 + tk * tn * 1 + tn * 2 + tm * tn * 2) + tm * tn * 4
    vmem_limit = max(blk_bytes + (16 << 20), 32 << 20)

    out = pl.pallas_call(
        kernel,
        out_shape=jax.ShapeDtypeStruct((Mp, Np), jnp.bfloat16),
        grid_spec=pltpu.PrefetchScalarGridSpec(
            num_scalar_prefetch=1,                                    # ws_flat -> SMEM
            grid=grid,
            in_specs=[
                pl.BlockSpec((tm, tk), lambda i, j, k, ws: (i, k)),   # x    (bf16)
                pl.BlockSpec((tk, tn), lambda i, j, k, ws: (k, j)),   # W^T  (fp8)
                pl.BlockSpec((1, tn), lambda i, j, k, ws: (0, j)),    # bias (bf16)
            ],
            out_specs=pl.BlockSpec((tm, tn), lambda i, j, k, ws: (i, j)),
            scratch_shapes=[pltpu.VMEM((tm, tn), jnp.float32)],
        ),
        compiler_params=pltpu.CompilerParams(
            dimension_semantics=("parallel", "parallel", "arbitrary"),
            vmem_limit_bytes=vmem_limit),
        cost_estimate=cost,
    )(ws_flat, xq, w_t, bias2d)

    return out[:M, :out_features]


if __name__ == "__main__":
    # Module config (small): in/out features chosen so padded dims exercise >1 scale block.
    in_features, out_features = 200, 200
    batch = 8
    in_padded = (in_features + 127) // 128 * 128      # 256
    out_padded = (out_features + 63) // 64 * 64       # 256

    # Deterministic parameter init matching DeepGEMM_Linear.__init__ shapes.
    key = jax.random.PRNGKey(0)
    kx, kw, ks, kb = jax.random.split(key, 4)
    weight = jax.random.normal(kw, (out_padded, in_padded), jnp.float32) * (1.0 / np.sqrt(in_features))
    nb_blocks = (out_padded + 127) // 128
    kb_blocks = (in_padded + 127) // 128
    # Non-trivial (deterministic) block scales / bias to exercise the scale & bias paths.
    weight_scale = 0.5 + jax.random.uniform(ks, (nb_blocks, kb_blocks), jnp.float32)
    bias = (0.1 * jax.random.normal(kb, (out_padded,), jnp.float32)).astype(jnp.bfloat16)

    x = jax.random.normal(kx, (batch, in_features), jnp.float32)

    # One-time weight preprocessing (fp8 quantize + transpose), then the fused forward.
    w_t, ws_flat, bias2d = prepare_deepgemm_params(weight, weight_scale, bias)
    out = deepgemm_linear(x, w_t, ws_flat, bias2d, in_features, out_features)
    out = jax.block_until_ready(out)

    # Pure-JAX reference of the same fp8 block-scaled GEMM semantics.
    xp = jnp.zeros((batch, in_padded), jnp.float32).at[:, :in_features].set(x)
    xq_ref = xp.astype(jnp.float8_e4m3fn).astype(jnp.float32)
    wq_ref = weight.astype(jnp.float8_e4m3fn).astype(jnp.float32)
    ws_full = jnp.repeat(jnp.repeat(weight_scale, 128, axis=0)[:out_padded], 128, axis=1)[:, :in_padded]
    ref = (xq_ref @ (wq_ref * ws_full).T).astype(jnp.bfloat16) + bias.reshape(1, -1)
    ref = ref[:, :out_features]

    assert out.shape == (batch, out_features)
    assert out.dtype == jnp.bfloat16
    np.testing.assert_allclose(np.asarray(out, dtype=np.float32),
                               np.asarray(ref, dtype=np.float32),
                               rtol=2e-2, atol=2e-2)
    print("KERNEL_OK")

# TODO(synk): real DeepGEMM uses per-token 1x128 dynamic activation scales; this module
# hard-codes x_scale = 1.0, so the activation scale is folded away here.
</pallas_src>

<mosaic_0001>
module attributes {stable_mosaic.version = 11 : i64} {
  func.func @kernel(%arg0: i32, %arg1: i32, %arg2: i32, %arg3: memref<4xf32, #tpu.memory_space<smem>>, %arg4: memref<16x256xbf16, #tpu.memory_space<vmem>>, %arg5: memref<256x128xf8E4M3FN, #tpu.memory_space<vmem>>, %arg6: memref<1x128xbf16, #tpu.memory_space<vmem>>, %arg7: memref<16x128xbf16, #tpu.memory_space<vmem>>, %arg8: memref<16x128xf32, #tpu.memory_space<vmem>>) attributes {dimension_semantics = [#tpu.dimension_semantics<parallel>, #tpu.dimension_semantics<parallel>, #tpu.dimension_semantics<arbitrary>], iteration_bounds = array<i64: 1, 2, 1>, scalar_prefetch = 1 : i64, scratch_operands = 1 : i64, tpu.core_type = #tpu.core_type<tc>, window_params = [{transform_indices = @transform_0, window_bounds = array<i64: 16, 256>}, {transform_indices = @transform_1, window_bounds = array<i64: 256, 128>}, {transform_indices = @transform_2, window_bounds = array<i64: 1, 128>}, {transform_indices = @transform_3, window_bounds = array<i64: 16, 128>}]} {
    %c0_i32 = arith.constant 0 : i32
    %0 = arith.cmpi eq, %arg2, %c0_i32 : i32
    %1 = arith.extui %0 : i1 to i32
    %c0_i32_0 = arith.constant 0 : i32
    %2 = arith.cmpi ne, %1, %c0_i32_0 : i32
    scf.if %2 {
      %cst_26 = arith.constant 0.000000e+00 : f32
      %42 = vector.broadcast %cst_26 : f32 to vector<16x128xf32>
      %c0_27 = arith.constant 0 : index
      %c0_28 = arith.constant 0 : index
      %43 = vector.load %arg8[%c0_27, %c0_28] : memref<16x128xf32, #tpu.memory_space<vmem>>, vector<16x128xf32>
      tpu.vector_store %arg8[%c0_27, %c0_28], %42 {strides = array<i32>} : memref<16x128xf32, #tpu.memory_space<vmem>>, vector<16x128xf32>,
    } else {
    }
    %c2_i32 = arith.constant 2 : i32
    %3 = arith.muli %arg2, %c2_i32 : i32
    %c0_i32_1 = arith.constant 0 : i32
    %4 = arith.addi %3, %c0_i32_1 : i32
    %c0 = arith.constant 0 : index
    %c0_2 = arith.constant 0 : index
    %5 = vector.load %arg4[%c0, %c0_2] : memref<16x256xbf16, #tpu.memory_space<vmem>>, vector<16x128xbf16>
    %c0_3 = arith.constant 0 : index
    %c0_4 = arith.constant 0 : index
    %6 = vector.load %arg5[%c0_3, %c0_4] : memref<256x128xf8E4M3FN, #tpu.memory_space<vmem>>, vector<128x128xf8E4M3FN>
    %7 = arith.extf %6 : vector<128x128xf8E4M3FN> to vector<128x128xbf16>
    %cst = arith.constant dense<0.000000e+00> : vector<16x128xf32>
    %8 = tpu.matmul %5, %7, %cst {dimension_numbers = #tpu.dot_dimension_numbers<[1], [0], [0], [1], [0, 0, 1, 1], [], []>} : vector<16x128xbf16>, vector<128x128xbf16>, vector<16x128xf32> -> vector<16x128xf32>
    %c1_i32 = arith.constant 1 : i32
    %9 = arith.muli %arg1, %c1_i32 : i32
    %c0_i32_5 = arith.constant 0 : i32
    %10 = arith.addi %9, %c0_i32_5 : i32
    %c2_i32_6 = arith.constant 2 : i32
    %11 = arith.muli %10, %c2_i32_6 : i32
    %12 = arith.addi %11, %4 : i32
    %13 = arith.index_cast %12 : i32 to index
    %14 = memref.load %arg3[%13] : memref<4xf32, #tpu.memory_space<smem>>
    %15 = vector.broadcast %14 : f32 to vector<1x128xf32>
    %c0_7 = arith.constant 0 : index
    %c0_8 = arith.constant 0 : index
    %16 = vector.load %arg8[%c0_7, %c0_8] : memref<16x128xf32, #tpu.memory_space<vmem>>, vector<16x128xf32>
    %17 = vector.broadcast %15 : vector<1x128xf32> to vector<16x128xf32>
    %18 = arith.mulf %17, %8 : vector<16x128xf32>
    %19 = arith.addf %16, %18 : vector<16x128xf32>
    %c0_9 = arith.constant 0 : index
    %c0_10 = arith.constant 0 : index
    %20 = vector.load %arg8[%c0_9, %c0_10] : memref<16x128xf32, #tpu.memory_space<vmem>>, vector<16x128xf32>
    tpu.vector_store %arg8[%c0_9, %c0_10], %19 {strides = array<i32>} : memref<16x128xf32, #tpu.memory_space<vmem>>, vector<16x128xf32>,
    %c2_i32_11 = arith.constant 2 : i32
    %21 = arith.muli %arg2, %c2_i32_11 : i32
    %c1_i32_12 = arith.constant 1 : i32
    %22 = arith.addi %21, %c1_i32_12 : i32
    %c0_13 = arith.constant 0 : index
    %c128 = arith.constant 128 : index
    %23 = vector.load %arg4[%c0_13, %c128] : memref<16x256xbf16, #tpu.memory_space<vmem>>, vector<16x128xbf16>
    %c128_14 = arith.constant 128 : index
    %c0_15 = arith.constant 0 : index
    %24 = vector.load %arg5[%c128_14, %c0_15] : memref<256x128xf8E4M3FN, #tpu.memory_space<vmem>>, vector<128x128xf8E4M3FN>
    %25 = arith.extf %24 : vector<128x128xf8E4M3FN> to vector<128x128xbf16>
    %cst_16 = arith.constant dense<0.000000e+00> : vector<16x128xf32>
    %26 = tpu.matmul %23, %25, %cst_16 {dimension_numbers = #tpu.dot_dimension_numbers<[1], [0], [0], [1], [0, 0, 1, 1], [], []>} : vector<16x128xbf16>, vector<128x128xbf16>, vector<16x128xf32> -> vector<16x128xf32>
    %c1_i32_17 = arith.constant 1 : i32
    %27 = arith.muli %arg1, %c1_i32_17 : i32
    %c0_i32_18 = arith.constant 0 : i32
    %28 = arith.addi %27, %c0_i32_18 : i32
    %c2_i32_19 = arith.constant 2 : i32
    %29 = arith.muli %28, %c2_i32_19 : i32
    %30 = arith.addi %29, %22 : i32
    %31 = arith.index_cast %30 : i32 to index
    %32 = memref.load %arg3[%31] : memref<4xf32, #tpu.memory_space<smem>>
    %33 = vector.broadcast %32 : f32 to vector<1x128xf32>
    %c0_20 = arith.constant 0 : index
    %c0_21 = arith.constant 0 : index
    %34 = vector.load %arg8[%c0_20, %c0_21] : memref<16x128xf32, #tpu.memory_space<vmem>>, vector<16x128xf32>
    %35 = vector.broadcast %33 : vector<1x128xf32> to vector<16x128xf32>
    %36 = arith.mulf %35, %26 : vector<16x128xf32>
    %37 = arith.addf %34, %36 : vector<16x128xf32>
    %c0_22 = arith.constant 0 : index
    %c0_23 = arith.constant 0 : index
    %38 = vector.load %arg8[%c0_22, %c0_23] : memref<16x128xf32, #tpu.memory_space<vmem>>, vector<16x128xf32>
    tpu.vector_store %arg8[%c0_22, %c0_23], %37 {strides = array<i32>} : memref<16x128xf32, #tpu.memory_space<vmem>>, vector<16x128xf32>,
    %c0_i32_24 = arith.constant 0 : i32
    %39 = arith.cmpi eq, %arg2, %c0_i32_24 : i32
    %40 = arith.extui %39 : i1 to i32
    %c0_i32_25 = arith.constant 0 : i32
    %41 = arith.cmpi ne, %40, %c0_i32_25 : i32
    scf.if %41 {
      %c0_26 = arith.constant 0 : index
      %c0_27 = arith.constant 0 : index
      %42 = vector.load %arg8[%c0_26, %c0_27] : memref<16x128xf32, #tpu.memory_space<vmem>>, vector<16x128xf32>
      %43 = arith.truncf %42 : vector<16x128xf32> to vector<16x128xbf16>
      %c0_28 = arith.constant 0 : index
      %c0_29 = arith.constant 0 : index
      %44 = vector.load %arg6[%c0_28, %c0_29] : memref<1x128xbf16, #tpu.memory_space<vmem>>, vector<1x128xbf16>
      %45 = vector.broadcast %44 : vector<1x128xbf16> to vector<16x128xbf16>
      %46 = arith.addf %43, %45 : vector<16x128xbf16>
      %c0_30 = arith.constant 0 : index
      %c0_31 = arith.constant 0 : index
      %47 = vector.load %arg7[%c0_30, %c0_31] : memref<16x128xbf16, #tpu.memory_space<vmem>>, vector<16x128xbf16>
      tpu.vector_store %arg7[%c0_30, %c0_31], %46 {strides = array<i32>} : memref<16x128xbf16, #tpu.memory_space<vmem>>, vector<16x128xbf16>,
    } else {
    }
    return
  }
  func.func @transform_0(%arg0: i32, %arg1: i32, %arg2: i32, %arg3: memref<4xf32, #tpu.memory_space<smem>>) -> (i32, i32) {
    %c0_i32 = arith.constant 0 : i32
    return %arg0, %arg2 : i32, i32
  }
  func.func @transform_1(%arg0: i32, %arg1: i32, %arg2: i32, %arg3: memref<4xf32, #tpu.memory_space<smem>>) -> (i32, i32) {
    %c0_i32 = arith.constant 0 : i32
    return %arg2, %arg1 : i32, i32
  }
  func.func @transform_2(%arg0: i32, %arg1: i32, %arg2: i32, %arg3: memref<4xf32, #tpu.memory_space<smem>>) -> (i32, i32) {
    %c0_i32 = arith.constant 0 : i32
    %c0_i32_0 = arith.constant 0 : i32
    return %c0_i32, %arg1 : i32, i32
  }
  func.func @transform_3(%arg0: i32, %arg1: i32, %arg2: i32, %arg3: memref<4xf32, #tpu.memory_space<smem>>) -> (i32, i32) {
    %c0_i32 = arith.constant 0 : i32
    return %arg0, %arg1 : i32, i32
  }
}

</mosaic_0001>

<llo_original>
// kernel: deepgemm_linear.1
$region0: #{deepgemm_linear.1}
  #allocation0 [shape = 'u32[]', space=smem, size = 0x4, offset = 0x4, fixed_abs, tag = 'smem constant byte address 0x4 - core index']
  #allocation1 [shape = 'u32[144,128]{1,0:T(1,128)}', space=vmem, size = 0x12000, scoped, tag = 'internal scratch']
  #allocation2 [shape = 'f32[16,128]{1,0:T(8,128)}', space=vmem, size = 0x2000, scoped, tag = 'scratch operand']
  #allocation3 [shape = 's32[1]{0}', space=sflag, size = 0x4, scoped, tag = 'scoped memory for deepgemm_linear.1']
  #allocation4 [shape = 'u8[512]{0}', space=smem, size = 0x200, scoped, tag = 'prefetched SMEM operand 0']
  %s0 = inlined_call_operand.vmem [shape: f32[4], index: 0, kind: input, shape index: {}]
  %s1 = inlined_call_operand.vmem [shape: bf16[16,256], index: 1, kind: input, shape index: {}]
  %s2 = inlined_call_operand.hbm [shape: f8e4m3fn[256,256], index: 2, kind: input, shape index: {}]
  %s3 = inlined_call_operand.vmem [shape: bf16[1,256], index: 3, kind: input, shape index: {}]
  %s4 = inlined_call_operand.vmem [shape: bf16[16,256], index: 4, kind: output, shape index: {}]
  %s5 = sld [smem:[#allocation0]]
  $region126: #{deepgemm_linear.1} parent=0
    _
  %s7 = ssub.s32 1, %s5
  %s8 = scalar_select 0, %s7, %s5
  %s9 = sshll.u32 %s0, 4
  %s10 = int_to_ptr.vmem [resolvable:$true] %s9
  %12 = dma.vmem_to_smem %s10, 16, [#allocation4], [#allocation3]
  %13 = dma.done [#allocation3], 16
  %14 = sfence
  $region1: #{deepgemm_linear.1} parent=0
    #allocation5 [shape = 'u8[65536]{0}', space=vmem, size = 0x10000, scoped, tag = 'input window, operand 2']
    #allocation6 [shape = 's32[2]{0}', space=sflag, size = 0x8, scoped, tag = 'scoped memory for deepgemm_linear.1']
    #allocation7 [shape = 'u8[8192]{0}', space=vmem, size = 0x2000, scoped, tag = 'output window, operand 0']
    %15 = vsyncpa [#allocation6], 0
    %s16 = scalar_lea.sflag [#allocation6], 1
    %17 = vsyncpa %s16, 0
    loop: start=0, step=1, limit=4
    $region2: #{deepgemm_linear.1} parent=1 // loop_pre_header
      _
    $region3: #{deepgemm_linear.1} parent=1 // loop_header
      %s19 = sphi 0, %s23
      %p20 = scmp.ge.s32.totalorder %s19, 4
      %s26 = sphi 0, %s45
      %s27 = sphi 0, %s41
      %s28 = sphi 0, %s37
      %s29 = sphi 0, %s26
      %s30 = sphi 0, %s27
      %s31 = sphi 0, %s28
      %s32 = sphi 0, %s29
      %s33 = sphi 0, %s30
      %s34 = sphi 0, %s31
      %s50 = sphi 0, %s52
      %s53 = sphi 0, %s50
      %s54 = sphi 0, %s53
      %s70 = sphi 0, %s54
      %s78 = sphi 0, %s80
      %s81 = sphi 0, %s78
      %s82 = sphi 0, %s81
      %s98 = sphi 0, %s82
      %s104 = sphi 0, %s106
      %s107 = sphi 0, %s104
      %s108 = sphi 0, %s107
      %s124 = sphi 0, %s108
      %s132 = sphi 0, %s134
      %s135 = sphi 0, %s132
      %s136 = sphi 0, %s135
      %s152 = sphi 0, %s136
    $region4: #{deepgemm_linear.1} parent=1 // loop_header_branch
      %22 = sbr.rel (%p20) target = $region8
    $region5: #{deepgemm_linear.1} parent=1 // loop_body
      %s24 = ssub.s32 %s19, 1
      %s25 = ssub.s32 %s19, 2
      %s35 = sadd.s32 1, %s28
      %p36 = scmp.ge.s32.totalorder %s35, 1
      %s37 = scalar_select %p36, 0, %s35
      %s38 = sadd.s32 1, %s27
      %s39 = scalar_select %p36, %s38, %s27
      %p40 = scmp.ge.s32.totalorder %s39, 2
      %s41 = scalar_select %p40, 0, %s39
      %s42 = sadd.s32 1, %s26
      %s43 = scalar_select %p40, %s42, %s26
      %p44 = scmp.ge.s32.totalorder %s43, 1
      %s45 = scalar_select %p44, 0, %s43
      %s46 = ssub.s32 %s26, %s45
      %s47 = ssub.s32 %s28, %s37
      %s48 = sor.u32 %s46, %s47
      %p49 = scmp.eq.s32.totalorder %s48, 0
      %s51 = sadd.s32 %s50, 1
      %s52 = scalar_select %p49, %s50, %s51
      %p55 = pneg %p49
      %p56 = scmp.eq.s32.totalorder %s19, 1
      %p57 = por %p55, %p56
      %p58 = scmp.ne.s32.totalorder %s50, %s53
      %p59 = scmp.eq.s32.totalorder %s19, 0
      %p60 = por %p58, %p59
      %p61 = scmp.ne.s32.totalorder %s50, %s53
      %p62 = scmp.eq.s32.totalorder %s24, 1
      %p63 = por %p61, %p62
      %p64 = scmp.ne.s32.totalorder %s53, %s54
      %p65 = scmp.eq.s32.totalorder %s24, 0
      %p66 = por %p64, %p65
      %p67 = scmp.ne.s32.totalorder %s53, %s54
      %p68 = scmp.eq.s32.totalorder %s25, 1
      %p69 = por %p67, %p68
      %p71 = scmp.ne.s32.totalorder %s54, %s70
      %p72 = scmp.eq.s32.totalorder %s25, 0
      %p73 = por %p71, %p72
      %s74 = ssub.s32 %s28, %s37
      %s75 = ssub.s32 %s27, %s41
      %s76 = sor.u32 %s74, %s75
      %p77 = scmp.eq.s32.totalorder %s76, 0
      %s79 = sadd.s32 %s78, 1
      %s80 = scalar_select %p77, %s78, %s79
      %p83 = pneg %p77
      %p84 = scmp.eq.s32.totalorder %s19, 1
      %p85 = por %p83, %p84
      %p86 = scmp.ne.s32.totalorder %s78, %s81
      %p87 = scmp.eq.s32.totalorder %s19, 0
      %p88 = por %p86, %p87
      %p89 = scmp.ne.s32.totalorder %s78, %s81
      %p90 = scmp.eq.s32.totalorder %s24, 1
      %p91 = por %p89, %p90
      %p92 = scmp.ne.s32.totalorder %s81, %s82
      %p93 = scmp.eq.s32.totalorder %s24, 0
      %p94 = por %p92, %p93
      %p95 = scmp.ne.s32.totalorder %s81, %s82
      %p96 = scmp.eq.s32.totalorder %s25, 1
      %p97 = por %p95, %p96
      %p99 = scmp.ne.s32.totalorder %s82, %s98
      %p100 = scmp.eq.s32.totalorder %s25, 0
      %p101 = por %p99, %p100
      %s102 = ssub.s32 %s27, %s41
      %p103 = scmp.eq.s32.totalorder %s102, 0
      %s105 = sadd.s32 %s104, 1
      %s106 = scalar_select %p103, %s104, %s105
      %p109 = pneg %p103
      %p110 = scmp.eq.s32.totalorder %s19, 1
      %p111 = por %p109, %p110
      %p112 = scmp.ne.s32.totalorder %s104, %s107
      %p113 = scmp.eq.s32.totalorder %s19, 0
      %p114 = por %p112, %p113
      %p115 = scmp.ne.s32.totalorder %s104, %s107
      %p116 = scmp.eq.s32.totalorder %s24, 1
      %p117 = por %p115, %p116
      %p118 = scmp.ne.s32.totalorder %s107, %s108
      %p119 = scmp.eq.s32.totalorder %s24, 0
      %p120 = por %p118, %p119
      %p121 = scmp.ne.s32.totalorder %s107, %s108
      %p122 = scmp.eq.s32.totalorder %s25, 1
      %p123 = por %p121, %p122
      %p125 = scmp.ne.s32.totalorder %s108, %s124
      %p126 = scmp.eq.s32.totalorder %s25, 0
      %p127 = por %p125, %p126
      %s128 = ssub.s32 %s26, %s45
      %s129 = ssub.s32 %s27, %s41
      %s130 = sor.u32 %s128, %s129
      %p131 = scmp.eq.s32.totalorder %s130, 0
      %s133 = sadd.s32 %s132, 1
      %s134 = scalar_select %p131, %s132, %s133
      %p137 = pneg %p131
      %p138 = scmp.eq.s32.totalorder %s19, 1
      %p139 = por %p137, %p138
      %p140 = scmp.ne.s32.totalorder %s132, %s135
      %p141 = scmp.eq.s32.totalorder %s19, 0
      %p142 = por %p140, %p141
      %p143 = scmp.ne.s32.totalorder %s132, %s135
      %p144 = scmp.eq.s32.totalorder %s24, 1
      %p145 = por %p143, %p144
      %p146 = scmp.ne.s32.totalorder %s135, %s136
      %p147 = scmp.eq.s32.totalorder %s24, 0
      %p148 = por %p146, %p147
      %p149 = scmp.ne.s32.totalorder %s135, %s136
      %p150 = scmp.eq.s32.totalorder %s25, 1
      %p151 = por %p149, %p150
      %p153 = scmp.ne.s32.totalorder %s136, %s152
      %p154 = scmp.eq.s32.totalorder %s25, 0
      %p155 = por %p153, %p154
      %p156 = scmp.le.s32.totalorder 1, %s19
      %p157 = scmp.lt.s32.totalorder %s19, 3
      %p158 = pnand %p156, %p157
      %p159 = pneg %p158
      // Predicated region
      $region9: #{deepgemm_linear.1} parent=5 // pred_check
        _
      $region10: #{deepgemm_linear.1} parent=5 // pred_check_branch
        %161 = sbr.rel (%p158) target = $region12
      $region11: #{deepgemm_linear.1} parent=5 // pred_region
        %s162 = ssub.s32 %s19, 1
        // Predicated region
        $region13: #{deepgemm_linear.1} parent=11 // pred_check
          %p163 = pneg %p66
        $region14: #{deepgemm_linear.1} parent=11 // pred_check_branch
          %165 = sbr.rel (%p163) target = $region16
        $region15: #{deepgemm_linear.1} parent=11 // pred_region
          %s166 = smul.u32 2, %s29
          %s167 = smul.u32 2, %s31
          %p168 = scmp.lt.s32.totalorder %s166, 1
          %s169 = scalar_select %p168, %s166, 1
          %p170 = scmp.lt.s32.totalorder %s167, 1
          %s171 = scalar_select %p170, %s167, 1
          %s172 = smul.addr %s169, 2
          %s173 = sadd.s32 %s171, %s172
          %s174 = smul.addr %s173, 4
          %s175 = scalar_lea.vmem %s1, %s174
          %s176 = smul.u32 2, %s29
          %s177 = smul.u32 2, %s31
        $region16: #{deepgemm_linear.1} parent=11 // pred_fallthru
          _
      $region12: #{deepgemm_linear.1} parent=5 // pred_fallthru
        _
      %p178 = scmp.lt.s32.totalorder %s19, 2
      // Predicated region
      $region17: #{deepgemm_linear.1} parent=5 // pred_check
        %p179 = pneg %p178
      $region18: #{deepgemm_linear.1} parent=5 // pred_check_branch
        %181 = sbr.rel (%p179) target = $region20
      $region19: #{deepgemm_linear.1} parent=5 // pred_region
        // Predicated region
        $region21: #{deepgemm_linear.1} parent=19 // pred_check
          %p182 = pneg %p88
        $region22: #{deepgemm_linear.1} parent=19 // pred_check_branch
          %184 = sbr.rel (%p182) target = $region24
        $region23: #{deepgemm_linear.1} parent=19 // pred_region
          %s185 = sand.u32 %s78, 1
          %s186 = scalar_lea.sflag [#allocation6], %s185
          %s187 = sand.u32 %s78, 1
          %s188 = smul.addr %s187, 64
          %s189 = scalar_lea.vmem [#allocation5], %s188
          %s190 = smul.u32 8, %s28
          %s192 = ssub.s32 1024, 1024
          %193 = vsyncadd %s186, %s192
          %s194 = smul.addr %s190, 2
          %s195 = sadd.s32 %s27, %s194
          %s196 = smul.addr %s195, 128
          %s197 = scalar_lea.hbm %s2, %s196
          %s198 = sshll.u32 %s189, 4
          %s199 = int_to_ptr.vmem [resolvable:$true] %s198
          %204 = dma.hbm_to_vmem [thread:$0]  %s197, 1024, %s199, %s186, 256, 128, 8
        $region24: #{deepgemm_linear.1} parent=19 // pred_fallthru
          _
        // Predicated region
        $region25: #{deepgemm_linear.1} parent=19 // pred_check
          %p205 = pneg %p114
        $region26: #{deepgemm_linear.1} parent=19 // pred_check_branch
          %207 = sbr.rel (%p205) target = $region28
        $region27: #{deepgemm_linear.1} parent=19 // pred_region
          %p208 = scmp.lt.s32.totalorder %s27, 1
          %s209 = scalar_select %p208, %s27, 1
          %s210 = scalar_lea.vmem %s3, %s209
        $region28: #{deepgemm_linear.1} parent=19 // pred_fallthru
          _
      $region20: #{deepgemm_linear.1} parent=5 // pred_fallthru
        _
      %p211 = scmp.le.s32.totalorder 1, %s19
      %p212 = scmp.lt.s32.totalorder %s19, 3
      %p213 = pnand %p211, %p212
      %p214 = pneg %p213
      // Predicated region
      $region29: #{deepgemm_linear.1} parent=5 // pred_check
        _
      $region30: #{deepgemm_linear.1} parent=5 // pred_check_branch
        %216 = sbr.rel (%p213) target = $region32
      $region31: #{deepgemm_linear.1} parent=5 // pred_region
        %s217 = ssub.s32 %s19, 1
        %s218 = sand.u32 %s81, 1
        %s219 = scalar_lea.sflag [#allocation6], %s218
        %s220 = sand.u32 %s81, 1
        %s221 = smul.addr %s220, 64
        %s222 = scalar_lea.vmem [#allocation5], %s221
        // Predicated region
        $region33: #{deepgemm_linear.1} parent=31 // pred_check
          %p223 = pneg %p94
        $region34: #{deepgemm_linear.1} parent=31 // pred_check_branch
          %225 = sbr.rel (%p223) target = $region36
        $region35: #{deepgemm_linear.1} parent=31 // pred_region
          %226 = dma.done %s219, 1024
        $region36: #{deepgemm_linear.1} parent=31 // pred_fallthru
          _
        %s227 = smul.u32 2, %s29
        %s228 = smul.u32 2, %s31
        %p229 = scmp.lt.s32.totalorder %s227, 1
        %s230 = scalar_select %p229, %s227, 1
        %p231 = scmp.lt.s32.totalorder %s228, 1
        %s232 = scalar_select %p231, %s228, 1
        %s233 = smul.addr %s230, 2
        %s234 = sadd.s32 %s232, %s233
        %s235 = smul.addr %s234, 4
        %s236 = scalar_lea.vmem %s1, %s235
        %p237 = pneg %p66
        %p238 = pneg %p63
        %s239 = sand.u32 %s81, 1
        %s240 = scalar_lea.sflag [#allocation6], %s239
        %s241 = sand.u32 %s81, 1
        %s242 = smul.addr %s241, 64
        %s243 = scalar_lea.vmem [#allocation5], %s242
        %p244 = pneg %p94
        %p245 = pneg %p91
        %p246 = scmp.lt.s32.totalorder %s30, 1
        %s247 = scalar_select %p246, %s30, 1
        %s248 = scalar_lea.vmem %s3, %s247
        %p249 = pneg %p120
        %p250 = pneg %p117
        %p251 = pneg %p148
        %p252 = pneg %p145
        %s253 = sand.u32 %s135, 1
        %s254 = sand.u32 %s135, 1
        %s255 = smul.addr %s254, 8
        %s256 = scalar_lea.vmem [#allocation7], %s255
        %s257 = smul.u32 2, %s29
        %s258 = smul.u32 2, %s31
        %p259 = scmp.lt.s32.totalorder %s257, 1
        %s260 = scalar_select %p259, %s257, 1
        %p261 = scmp.lt.s32.totalorder %s258, 1
        %s262 = scalar_select %p261, %s258, 1
        %s263 = smul.addr %s260, 2
        %s264 = sadd.s32 %s262, %s263
        %s265 = smul.addr %s264, 4
        %s266 = scalar_lea.vmem %s1, %s265
        %s267 = smul.u32 2, %s29
        %s268 = smul.u32 2, %s31
        %s269 = smul.u32 8, %s31
        %p270 = scmp.lt.s32.totalorder %s30, 1
        %s271 = scalar_select %p270, %s30, 1
        %s272 = scalar_lea.vmem %s3, %s271
        %s273 = smul.u32 2, %s29
        %p275 = scmp.eq.s32.totalorder %s31, 0
        // Predicated region
        $region37: #{deepgemm_linear.1} parent=31 // pred_check
          %p276 = pneg %p275
        $region38: #{deepgemm_linear.1} parent=31 // pred_check_branch
          %278 = sbr.rel (%p276) target = $region40
        $region39: #{deepgemm_linear.1} parent=31 // pred_region
          %279 = vst [vmem:[#allocation2] sm:$0xff] 0.0
          %280 = vst [vmem:[#allocation2 + $0x8] sm:$0xff] 0.0
        $region40: #{deepgemm_linear.1} parent=31 // pred_fallthru
          _
        %s281 = smul.u32 %s31, 2
        %v282 = vld [vmem:[%s266] sm:$0xf]
        %v283 = vld [vmem:[%s266 + $0x8] sm:$0xf]
        %v284 = vld [vmem:[%s222] sm:$0xff]
        %v285 = vld [vmem:[%s222 + $0x8] sm:$0xff]
        %v286 = vld [vmem:[%s222 + $0x10] sm:$0xff]
        %v287 = vld [vmem:[%s222 + $0x18] sm:$0xff]
        $region41: #{deepgemm_linear.1} parent=31
          #allocation8 [shape = 'u8[4096]{0}', space=vmem, size = 0x1000, scoped, tag = 'scoped memory for deepgemm_linear.1']
          %288 = vst [vmem:[#allocation8] sm:$0xff] %v284
          %v289 = vld [vmem:[#allocation8] sm:$0x3]
          %v290 = vunpack.c.0.f8e4m3b11 %v289
          %v291 = vunpack.c.1.f8e4m3b11 %v289
          %v292 = vunpack.c.2.f8e4m3b11 %v289
          %v293 = vunpack.c.3.f8e4m3b11 %v289
          %v294 = vand.u32 2147483647, %v290
          %vm295 = vcmp.gt.f32.partialorder %v294, 29.0
          %vm296 = vcmp.ne.f32.partialorder %v290, %v290
          %v297 = vmul.f32 %v290, 16.0
          %v298 = vsel %vm296, -0.0, %v297
          %v299 = vsel %vm295, nan, %v298
          %v300 = vand.u32 2147483647, %v291
          %vm301 = vcmp.gt.f32.partialorder %v300, 29.0
          %vm302 = vcmp.ne.f32.partialorder %v291, %v291
          %v303 = vmul.f32 %v291, 16.0
          %v304 = vsel %vm302, -0.0, %v303
          %v305 = vsel %vm301, nan, %v304
          %v306 = vand.u32 2147483647, %v292
          %vm307 = vcmp.gt.f32.partialorder %v306, 29.0
          %vm308 = vcmp.ne.f32.partialorder %v292, %v292
          %v309 = vmul.f32 %v292, 16.0
          %v310 = vsel %vm308, -0.0, %v309
          %v311 = vsel %vm307, nan, %v310
          %v312 = vand.u32 2147483647, %v293
          %vm313 = vcmp.gt.f32.partialorder %v312, 29.0
          %vm314 = vcmp.ne.f32.partialorder %v293, %v293
          %v315 = vmul.f32 %v293, 16.0
          %v316 = vsel %vm314, -0.0, %v315
          %v317 = vsel %vm313, nan, %v316
        $region42: #{deepgemm_linear.1} parent=31
          #allocation9 [shape = 'u8[4096]{0}', space=vmem, size = 0x1000, scoped, tag = 'scoped memory for deepgemm_linear.1']
          %318 = vst [vmem:[#allocation9] sm:$0xff] %v284
          %s319 = scalar_lea.vmem [#allocation9], 2
          %v320 = vld [vmem:[%s319] sm:$0x3]
          %v321 = vunpack.c.0.f8e4m3b11 %v320
          %v322 = vunpack.c.1.f8e4m3b11 %v320
          %v323 = vunpack.c.2.f8e4m3b11 %v320
          %v324 = vunpack.c.3.f8e4m3b11 %v320
          %v325 = vand.u32 2147483647, %v321
          %vm326 = vcmp.gt.f32.partialorder %v325, 29.0
          %vm327 = vcmp.ne.f32.partialorder %v321, %v321
          %v328 = vmul.f32 %v321, 16.0
          %v329 = vsel %vm327, -0.0, %v328
          %v330 = vsel %vm326, nan, %v329
          %v331 = vand.u32 2147483647, %v322
          %vm332 = vcmp.gt.f32.partialorder %v331, 29.0
          %vm333 = vcmp.ne.f32.partialorder %v322, %v322
          %v334 = vmul.f32 %v322, 16.0
          %v335 = vsel %vm333, -0.0, %v334
          %v336 = vsel %vm332, nan, %v335
          %v337 = vand.u32 2147483647, %v323
          %vm338 = vcmp.gt.f32.partialorder %v337, 29.0
          %vm339 = vcmp.ne.f32.partialorder %v323, %v323
          %v340 = vmul.f32 %v323, 16.0
          %v341 = vsel %vm339, -0.0, %v340
          %v342 = vsel %vm338, nan, %v341
          %v343 = vand.u32 2147483647, %v324
          %vm344 = vcmp.gt.f32.partialorder %v343, 29.0
          %vm345 = vcmp.ne.f32.partialorder %v324, %v324
          %v346 = vmul.f32 %v324, 16.0
          %v347 = vsel %vm345, -0.0, %v346
          %v348 = vsel %vm344, nan, %v347
        $region43: #{deepgemm_linear.1} parent=31
          #allocation10 [shape = 'u8[4096]{0}', space=vmem, size = 0x1000, scoped, tag = 'scoped memory for deepgemm_linear.1']
          %349 = vst [vmem:[#allocation10] sm:$0xff] %v284
          %s350 = scalar_lea.vmem [#allocation10], 4
          %v351 = vld [vmem:[%s350] sm:$0x3]
          %v352 = vunpack.c.0.f8e4m3b11 %v351
          %v353 = vunpack.c.1.f8e4m3b11 %v351
          %v354 = vunpack.c.2.f8e4m3b11 %v351
          %v355 = vunpack.c.3.f8e4m3b11 %v351
          %v356 = vand.u32 2147483647, %v352
          %vm357 = vcmp.gt.f32.partialorder %v356, 29.0
          %vm358 = vcmp.ne.f32.partialorder %v352, %v352
          %v359 = vmul.f32 %v352, 16.0
          %v360 = vsel %vm358, -0.0, %v359
          %v361 = vsel %vm357, nan, %v360
          %v362 = vand.u32 2147483647, %v353
          %vm363 = vcmp.gt.f32.partialorder %v362, 29.0
          %vm364 = vcmp.ne.f32.partialorder %v353, %v353
          %v365 = vmul.f32 %v353, 16.0
          %v366 = vsel %vm364, -0.0, %v365
          %v367 = vsel %vm363, nan, %v366
          %v368 = vand.u32 2147483647, %v354
          %vm369 = vcmp.gt.f32.partialorder %v368, 29.0
          %vm370 = vcmp.ne.f32.partialorder %v354, %v354
          %v371 = vmul.f32 %v354, 16.0
          %v372 = vsel %vm370, -0.0, %v371
          %v373 = vsel %vm369, nan, %v372
          %v374 = vand.u32 2147483647, %v355
          %vm375 = vcmp.gt.f32.partialorder %v374, 29.0
          %vm376 = vcmp.ne.f32.partialorder %v355, %v355
          %v377 = vmul.f32 %v355, 16.0
          %v378 = vsel %vm376, -0.0, %v377
          %v379 = vsel %vm375, nan, %v378
        $region44: #{deepgemm_linear.1} parent=31
          #allocation11 [shape = 'u8[4096]{0}', space=vmem, size = 0x1000, scoped, tag = 'scoped memory for deepgemm_linear.1']
          %380 = vst [vmem:[#allocation11] sm:$0xff] %v284
          %s381 = scalar_lea.vmem [#allocation11], 6
          %v382 = vld [vmem:[%s381] sm:$0x3]
          %v383 = vunpack.c.0.f8e4m3b11 %v382
          %v384 = vunpack.c.1.f8e4m3b11 %v382
          %v385 = vunpack.c.2.f8e4m3b11 %v382
          %v386 = vunpack.c.3.f8e4m3b11 %v382
          %v387 = vand.u32 2147483647, %v383
          %vm388 = vcmp.gt.f32.partialorder %v387, 29.0
          %vm389 = vcmp.ne.f32.partialorder %v383, %v383
          %v390 = vmul.f32 %v383, 16.0
          %v391 = vsel %vm389, -0.0, %v390
          %v392 = vsel %vm388, nan, %v391
          %v393 = vand.u32 2147483647, %v384
          %vm394 = vcmp.gt.f32.partialorder %v393, 29.0
          %vm395 = vcmp.ne.f32.partialorder %v384, %v384
          %v396 = vmul.f32 %v384, 16.0
          %v397 = vsel %vm395, -0.0, %v396
          %v398 = vsel %vm394, nan, %v397
          %v399 = vand.u32 2147483647, %v385
          %vm400 = vcmp.gt.f32.partialorder %v399, 29.0
          %vm401 = vcmp.ne.f32.partialorder %v385, %v385
          %v402 = vmul.f32 %v385, 16.0
          %v403 = vsel %vm401, -0.0, %v402
          %v404 = vsel %vm400, nan, %v403
          %v405 = vand.u32 2147483647, %v386
          %vm406 = vcmp.gt.f32.partialorder %v405, 29.0
          %vm407 = vcmp.ne.f32.partialorder %v386, %v386
          %v408 = vmul.f32 %v386, 16.0
          %v409 = vsel %vm407, -0.0, %v408
          %v410 = vsel %vm406, nan, %v409
        $region45: #{deepgemm_linear.1} parent=31
          #allocation12 [shape = 'u8[4096]{0}', space=vmem, size = 0x1000, scoped, tag = 'scoped memory for deepgemm_linear.1']
          %411 = vst [vmem:[#allocation12] sm:$0xff] %v285
          %v412 = vld [vmem:[#allocation12] sm:$0x3]
          %v413 = vunpack.c.0.f8e4m3b11 %v412
          %v414 = vunpack.c.1.f8e4m3b11 %v412
          %v415 = vunpack.c.2.f8e4m3b11 %v412
          %v416 = vunpack.c.3.f8e4m3b11 %v412
          %v417 = vand.u32 2147483647, %v413
          %vm418 = vcmp.gt.f32.partialorder %v417, 29.0
          %vm419 = vcmp.ne.f32.partialorder %v413, %v413
          %v420 = vmul.f32 %v413, 16.0
          %v421 = vsel %vm419, -0.0, %v420
          %v422 = vsel %vm418, nan, %v421
          %v423 = vand.u32 2147483647, %v414
          %vm424 = vcmp.gt.f32.partialorder %v423, 29.0
          %vm425 = vcmp.ne.f32.partialorder %v414, %v414
          %v426 = vmul.f32 %v414, 16.0
          %v427 = vsel %vm425, -0.0, %v426
          %v428 = vsel %vm424, nan, %v427
          %v429 = vand.u32 2147483647, %v415
          %vm430 = vcmp.gt.f32.partialorder %v429, 29.0
          %vm431 = vcmp.ne.f32.partialorder %v415, %v415
          %v432 = vmul.f32 %v415, 16.0
          %v433 = vsel %vm431, -0.0, %v432
          %v434 = vsel %vm430, nan, %v433
          %v435 = vand.u32 2147483647, %v416
          %vm436 = vcmp.gt.f32.partialorder %v435, 29.0
          %vm437 = vcmp.ne.f32.partialorder %v416, %v416
          %v438 = vmul.f32 %v416, 16.0
          %v439 = vsel %vm437, -0.0, %v438
          %v440 = vsel %vm436, nan, %v439
        $region46: #{deepgemm_linear.1} parent=31
          #allocation13 [shape = 'u8[4096]{0}', space=vmem, size = 0x1000, scoped, tag = 'scoped memory for deepgemm_linear.1']
          %441 = vst [vmem:[#allocation13] sm:$0xff] %v285
          %s442 = scalar_lea.vmem [#allocation13], 2
          %v443 = vld [vmem:[%s442] sm:$0x3]
          %v444 = vunpack.c.0.f8e4m3b11 %v443
          %v445 = vunpack.c.1.f8e4m3b11 %v443
          %v446 = vunpack.c.2.f8e4m3b11 %v443
          %v447 = vunpack.c.3.f8e4m3b11 %v443
          %v448 = vand.u32 2147483647, %v444
          %vm449 = vcmp.gt.f32.partialorder %v448, 29.0
          %vm450 = vcmp.ne.f32.partialorder %v444, %v444
          %v451 = vmul.f32 %v444, 16.0
          %v452 = vsel %vm450, -0.0, %v451
          %v453 = vsel %vm449, nan, %v452
          %v454 = vand.u32 2147483647, %v445
          %vm455 = vcmp.gt.f32.partialorder %v454, 29.0
          %vm456 = vcmp.ne.f32.partialorder %v445, %v445
          %v457 = vmul.f32 %v445, 16.0
          %v458 = vsel %vm456, -0.0, %v457
          %v459 = vsel %vm455, nan, %v458
          %v460 = vand.u32 2147483647, %v446
          %vm461 = vcmp.gt.f32.partialorder %v460, 29.0
          %vm462 = vcmp.ne.f32.partialorder %v446, %v446
          %v463 = vmul.f32 %v446, 16.0
          %v464 = vsel %vm462, -0.0, %v463
          %v465 = vsel %vm461, nan, %v464
          %v466 = vand.u32 2147483647, %v447
          %vm467 = vcmp.gt.f32.partialorder %v466, 29.0
          %vm468 = vcmp.ne.f32.partialorder %v447, %v447
          %v469 = vmul.f32 %v447, 16.0
          %v470 = vsel %vm468, -0.0, %v469
          %v471 = vsel %vm467, nan, %v470
        $region47: #{deepgemm_linear.1} parent=31
          #allocation14 [shape = 'u8[4096]{0}', space=vmem, size = 0x1000, scoped, tag = 'scoped memory for deepgemm_linear.1']
          %472 = vst [vmem:[#allocation14] sm:$0xff] %v285
          %s473 = scalar_lea.vmem [#allocation14], 4
          %v474 = vld [vmem:[%s473] sm:$0x3]
          %v475 = vunpack.c.0.f8e4m3b11 %v474
          %v476 = vunpack.c.1.f8e4m3b11 %v474
          %v477 = vunpack.c.2.f8e4m3b11 %v474
          %v478 = vunpack.c.3.f8e4m3b11 %v474
          %v479 = vand.u32 2147483647, %v475
          %vm480 = vcmp.gt.f32.partialorder %v479, 29.0
          %vm481 = vcmp.ne.f32.partialorder %v475, %v475
          %v482 = vmul.f32 %v475, 16.0
          %v483 = vsel %vm481, -0.0, %v482
          %v484 = vsel %vm480, nan, %v483
          %v485 = vand.u32 2147483647, %v476
          %vm486 = vcmp.gt.f32.partialorder %v485, 29.0
          %vm487 = vcmp.ne.f32.partialorder %v476, %v476
          %v488 = vmul.f32 %v476, 16.0
          %v489 = vsel %vm487, -0.0, %v488
          %v490 = vsel %vm486, nan, %v489
          %v491 = vand.u32 2147483647, %v477
          %vm492 = vcmp.gt.f32.partialorder %v491, 29.0
          %vm493 = vcmp.ne.f32.partialorder %v477, %v477
          %v494 = vmul.f32 %v477, 16.0
          %v495 = vsel %vm493, -0.0, %v494
          %v496 = vsel %vm492, nan, %v495
          %v497 = vand.u32 2147483647, %v478
          %vm498 = vcmp.gt.f32.partialorder %v497, 29.0
          %vm499 = vcmp.ne.f32.partialorder %v478, %v478
          %v500 = vmul.f32 %v478, 16.0
          %v501 = vsel %vm499, -0.0, %v500
          %v502 = vsel %vm498, nan, %v501
        $region48: #{deepgemm_linear.1} parent=31
          #allocation15 [shape = 'u8[4096]{0}', space=vmem, size = 0x1000, scoped, tag = 'scoped memory for deepgemm_linear.1']
          %503 = vst [vmem:[#allocation15] sm:$0xff] %v285
          %s504 = scalar_lea.vmem [#allocation15], 6
          %v505 = vld [vmem:[%s504] sm:$0x3]
          %v506 = vunpack.c.0.f8e4m3b11 %v505
          %v507 = vunpack.c.1.f8e4m3b11 %v505
          %v508 = vunpack.c.2.f8e4m3b11 %v505
          %v509 = vunpack.c.3.f8e4m3b11 %v505
          %v510 = vand.u32 2147483647, %v506
          %vm511 = vcmp.gt.f32.partialorder %v510, 29.0
          %vm512 = vcmp.ne.f32.partialorder %v506, %v506
          %v513 = vmul.f32 %v506, 16.0
          %v514 = vsel %vm512, -0.0, %v513
          %v515 = vsel %vm511, nan, %v514
          %v516 = vand.u32 2147483647, %v507
          %vm517 = vcmp.gt.f32.partialorder %v516, 29.0
          %vm518 = vcmp.ne.f32.partialorder %v507, %v507
          %v519 = vmul.f32 %v507, 16.0
          %v520 = vsel %vm518, -0.0, %v519
          %v521 = vsel %vm517, nan, %v520
          %v522 = vand.u32 2147483647, %v508
          %vm523 = vcmp.gt.f32.partialorder %v522, 29.0
          %vm524 = vcmp.ne.f32.partialorder %v508, %v508
          %v525 = vmul.f32 %v508, 16.0
          %v526 = vsel %vm524, -0.0, %v525
          %v527 = vsel %vm523, nan, %v526
          %v528 = vand.u32 2147483647, %v509
          %vm529 = vcmp.gt.f32.partialorder %v528, 29.0
          %vm530 = vcmp.ne.f32.partialorder %v509, %v509
          %v531 = vmul.f32 %v509, 16.0
          %v532 = vsel %vm530, -0.0, %v531
          %v533 = vsel %vm529, nan, %v532
        $region49: #{deepgemm_linear.1} parent=31
          #allocation16 [shape = 'u8[4096]{0}', space=vmem, size = 0x1000, scoped, tag = 'scoped memory for deepgemm_linear.1']
          %534 = vst [vmem:[#allocation16] sm:$0xff] %v286
          %v535 = vld [vmem:[#allocation16] sm:$0x3]
          %v536 = vunpack.c.0.f8e4m3b11 %v535
          %v537 = vunpack.c.1.f8e4m3b11 %v535
          %v538 = vunpack.c.2.f8e4m3b11 %v535
          %v539 = vunpack.c.3.f8e4m3b11 %v535
          %v540 = vand.u32 2147483647, %v536
          %vm541 = vcmp.gt.f32.partialorder %v540, 29.0
          %vm542 = vcmp.ne.f32.partialorder %v536, %v536
          %v543 = vmul.f32 %v536, 16.0
          %v544 = vsel %vm542, -0.0, %v543
          %v545 = vsel %vm541, nan, %v544
          %v546 = vand.u32 2147483647, %v537
          %vm547 = vcmp.gt.f32.partialorder %v546, 29.0
          %vm548 = vcmp.ne.f32.partialorder %v537, %v537
          %v549 = vmul.f32 %v537, 16.0
          %v550 = vsel %vm548, -0.0, %v549
          %v551 = vsel %vm547, nan, %v550
          %v552 = vand.u32 2147483647, %v538
          %vm553 = vcmp.gt.f32.partialorder %v552, 29.0
          %vm554 = vcmp.ne.f32.partialorder %v538, %v538
          %v555 = vmul.f32 %v538, 16.0
          %v556 = vsel %vm554, -0.0, %v555
          %v557 = vsel %vm553, nan, %v556
          %v558 = vand.u32 2147483647, %v539
          %vm559 = vcmp.gt.f32.partialorder %v558, 29.0
          %vm560 = vcmp.ne.f32.partialorder %v539, %v539
          %v561 = vmul.f32 %v539, 16.0
          %v562 = vsel %vm560, -0.0, %v561
          %v563 = vsel %vm559, nan, %v562
        $region50: #{deepgemm_linear.1} parent=31
          #allocation17 [shape = 'u8[4096]{0}', space=vmem, size = 0x1000, scoped, tag = 'scoped memory for deepgemm_linear.1']
          %564 = vst [vmem:[#allocation17] sm:$0xff] %v286
          %s565 = scalar_lea.vmem [#allocation17], 2
          %v566 = vld [vmem:[%s565] sm:$0x3]
          %v567 = vunpack.c.0.f8e4m3b11 %v566
          %v568 = vunpack.c.1.f8e4m3b11 %v566
          %v569 = vunpack.c.2.f8e4m3b11 %v566
          %v570 = vunpack.c.3.f8e4m3b11 %v566
          %v571 = vand.u32 2147483647, %v567
          %vm572 = vcmp.gt.f32.partialorder %v571, 29.0
          %vm573 = vcmp.ne.f32.partialorder %v567, %v567
          %v574 = vmul.f32 %v567, 16.0
          %v575 = vsel %vm573, -0.0, %v574
          %v576 = vsel %vm572, nan, %v575
          %v577 = vand.u32 2147483647, %v568
          %vm578 = vcmp.gt.f32.partialorder %v577, 29.0
          %vm579 = vcmp.ne.f32.partialorder %v568, %v568
          %v580 = vmul.f32 %v568, 16.0
          %v581 = vsel %vm579, -0.0, %v580
          %v582 = vsel %vm578, nan, %v581
          %v583 = vand.u32 2147483647, %v569
          %vm584 = vcmp.gt.f32.partialorder %v583, 29.0
          %vm585 = vcmp.ne.f32.partialorder %v569, %v569
          %v586 = vmul.f32 %v569, 16.0
          %v587 = vsel %vm585, -0.0, %v586
          %v588 = vsel %vm584, nan, %v587
          %v589 = vand.u32 2147483647, %v570
          %vm590 = vcmp.gt.f32.partialorder %v589, 29.0
          %vm591 = vcmp.ne.f32.partialorder %v570, %v570
          %v592 = vmul.f32 %v570, 16.0
          %v593 = vsel %vm591, -0.0, %v592
          %v594 = vsel %vm590, nan, %v593
        $region51: #{deepgemm_linear.1} parent=31
          #allocation18 [shape = 'u8[4096]{0}', space=vmem, size = 0x1000, scoped, tag = 'scoped memory for deepgemm_linear.1']
          %595 = vst [vmem:[#allocation18] sm:$0xff] %v286
          %s596 = scalar_lea.vmem [#allocation18], 4
          %v597 = vld [vmem:[%s596] sm:$0x3]
          %v598 = vunpack.c.0.f8e4m3b11 %v597
          %v599 = vunpack.c.1.f8e4m3b11 %v597
          %v600 = vunpack.c.2.f8e4m3b11 %v597
          %v601 = vunpack.c.3.f8e4m3b11 %v597
          %v602 = vand.u32 2147483647, %v598
          %vm603 = vcmp.gt.f32.partialorder %v602, 29.0
          %vm604 = vcmp.ne.f32.partialorder %v598, %v598
          %v605 = vmul.f32 %v598, 16.0
          %v606 = vsel %vm604, -0.0, %v605
          %v607 = vsel %vm603, nan, %v606
          %v608 = vand.u32 2147483647, %v599
          %vm609 = vcmp.gt.f32.partialorder %v608, 29.0
          %vm610 = vcmp.ne.f32.partialorder %v599, %v599
          %v611 = vmul.f32 %v599, 16.0
          %v612 = vsel %vm610, -0.0, %v611
          %v613 = vsel %vm609, nan, %v612
          %v614 = vand.u32 2147483647, %v600
          %vm615 = vcmp.gt.f32.partialorder %v614, 29.0
          %vm616 = vcmp.ne.f32.partialorder %v600, %v600
          %v617 = vmul.f32 %v600, 16.0
          %v618 = vsel %vm616, -0.0, %v617
          %v619 = vsel %vm615, nan, %v618
          %v620 = vand.u32 2147483647, %v601
          %vm621 = vcmp.gt.f32.partialorder %v620, 29.0
          %vm622 = vcmp.ne.f32.partialorder %v601, %v601
          %v623 = vmul.f32 %v601, 16.0
          %v624 = vsel %vm622, -0.0, %v623
          %v625 = vsel %vm621, nan, %v624
        $region52: #{deepgemm_linear.1} parent=31
          #allocation19 [shape = 'u8[4096]{0}', space=vmem, size = 0x1000, scoped, tag = 'scoped memory for deepgemm_linear.1']
          %626 = vst [vmem:[#allocation19] sm:$0xff] %v286
          %s627 = scalar_lea.vmem [#allocation19], 6
          %v628 = vld [vmem:[%s627] sm:$0x3]
          %v629 = vunpack.c.0.f8e4m3b11 %v628
          %v630 = vunpack.c.1.f8e4m3b11 %v628
          %v631 = vunpack.c.2.f8e4m3b11 %v628
          %v632 = vunpack.c.3.f8e4m3b11 %v628
          %v633 = vand.u32 2147483647, %v629
          %vm634 = vcmp.gt.f32.partialorder %v633, 29.0
          %vm635 = vcmp.ne.f32.partialorder %v629, %v629
          %v636 = vmul.f32 %v629, 16.0
          %v637 = vsel %vm635, -0.0, %v636
          %v638 = vsel %vm634, nan, %v637
          %v639 = vand.u32 2147483647, %v630
          %vm640 = vcmp.gt.f32.partialorder %v639, 29.0
          %vm641 = vcmp.ne.f32.partialorder %v630, %v630
          %v642 = vmul.f32 %v630, 16.0
          %v643 = vsel %vm641, -0.0, %v642
          %v644 = vsel %vm640, nan, %v643
          %v645 = vand.u32 2147483647, %v631
          %vm646 = vcmp.gt.f32.partialorder %v645, 29.0
          %vm647 = vcmp.ne.f32.partialorder %v631, %v631
          %v648 = vmul.f32 %v631, 16.0
          %v649 = vsel %vm647, -0.0, %v648
          %v650 = vsel %vm646, nan, %v649
          %v651 = vand.u32 2147483647, %v632
          %vm652 = vcmp.gt.f32.partialorder %v651, 29.0
          %vm653 = vcmp.ne.f32.partialorder %v632, %v632
          %v654 = vmul.f32 %v632, 16.0
          %v655 = vsel %vm653, -0.0, %v654
          %v656 = vsel %vm652, nan, %v655
        $region53: #{deepgemm_linear.1} parent=31
          #allocation20 [shape = 'u8[4096]{0}', space=vmem, size = 0x1000, scoped, tag = 'scoped memory for deepgemm_linear.1']
          %657 = vst [vmem:[#allocation20] sm:$0xff] %v287
          %v658 = vld [vmem:[#allocation20] sm:$0x3]
          %v659 = vunpack.c.0.f8e4m3b11 %v658
          %v660 = vunpack.c.1.f8e4m3b11 %v658
          %v661 = vunpack.c.2.f8e4m3b11 %v658
          %v662 = vunpack.c.3.f8e4m3b11 %v658
          %v663 = vand.u32 2147483647, %v659
          %vm664 = vcmp.gt.f32.partialorder %v663, 29.0
          %vm665 = vcmp.ne.f32.partialorder %v659, %v659
          %v666 = vmul.f32 %v659, 16.0
          %v667 = vsel %vm665, -0.0, %v666
          %v668 = vsel %vm664, nan, %v667
          %v669 = vand.u32 2147483647, %v660
          %vm670 = vcmp.gt.f32.partialorder %v669, 29.0
          %vm671 = vcmp.ne.f32.partialorder %v660, %v660
          %v672 = vmul.f32 %v660, 16.0
          %v673 = vsel %vm671, -0.0, %v672
          %v674 = vsel %vm670, nan, %v673
          %v675 = vand.u32 2147483647, %v661
          %vm676 = vcmp.gt.f32.partialorder %v675, 29.0
          %vm677 = vcmp.ne.f32.partialorder %v661, %v661
          %v678 = vmul.f32 %v661, 16.0
          %v679 = vsel %vm677, -0.0, %v678
          %v680 = vsel %vm676, nan, %v679
          %v681 = vand.u32 2147483647, %v662
          %vm682 = vcmp.gt.f32.partialorder %v681, 29.0
          %vm683 = vcmp.ne.f32.partialorder %v662, %v662
          %v684 = vmul.f32 %v662, 16.0
          %v685 = vsel %vm683, -0.0, %v684
          %v686 = vsel %vm682, nan, %v685
        $region54: #{deepgemm_linear.1} parent=31
          #allocation21 [shape = 'u8[4096]{0}', space=vmem, size = 0x1000, scoped, tag = 'scoped memory for deepgemm_linear.1']
          %687 = vst [vmem:[#allocation21] sm:$0xff] %v287
          %s688 = scalar_lea.vmem [#allocation21], 2
          %v689 = vld [vmem:[%s688] sm:$0x3]
          %v690 = vunpack.c.0.f8e4m3b11 %v689
          %v691 = vunpack.c.1.f8e4m3b11 %v689
          %v692 = vunpack.c.2.f8e4m3b11 %v689
          %v693 = vunpack.c.3.f8e4m3b11 %v689
          %v694 = vand.u32 2147483647, %v690
          %vm695 = vcmp.gt.f32.partialorder %v694, 29.0
          %vm696 = vcmp.ne.f32.partialorder %v690, %v690
          %v697 = vmul.f32 %v690, 16.0
          %v698 = vsel %vm696, -0.0, %v697
          %v699 = vsel %vm695, nan, %v698
          %v700 = vand.u32 2147483647, %v691
          %vm701 = vcmp.gt.f32.partialorder %v700, 29.0
          %vm702 = vcmp.ne.f32.partialorder %v691, %v691
          %v703 = vmul.f32 %v691, 16.0
          %v704 = vsel %vm702, -0.0, %v703
          %v705 = vsel %vm701, nan, %v704
          %v706 = vand.u32 2147483647, %v692
          %vm707 = vcmp.gt.f32.partialorder %v706, 29.0
          %vm708 = vcmp.ne.f32.partialorder %v692, %v692
          %v709 = vmul.f32 %v692, 16.0
          %v710 = vsel %vm708, -0.0, %v709
          %v711 = vsel %vm707, nan, %v710
          %v712 = vand.u32 2147483647, %v693
          %vm713 = vcmp.gt.f32.partialorder %v712, 29.0
          %vm714 = vcmp.ne.f32.partialorder %v693, %v693
          %v715 = vmul.f32 %v693, 16.0
          %v716 = vsel %vm714, -0.0, %v715
          %v717 = vsel %vm713, nan, %v716
        $region55: #{deepgemm_linear.1} parent=31
          #allocation22 [shape = 'u8[4096]{0}', space=vmem, size = 0x1000, scoped, tag = 'scoped memory for deepgemm_linear.1']
          %718 = vst [vmem:[#allocation22] sm:$0xff] %v287
          %s719 = scalar_lea.vmem [#allocation22], 4
          %v720 = vld [vmem:[%s719] sm:$0x3]
          %v721 = vunpack.c.0.f8e4m3b11 %v720
          %v722 = vunpack.c.1.f8e4m3b11 %v720
          %v723 = vunpack.c.2.f8e4m3b11 %v720
          %v724 = vunpack.c.3.f8e4m3b11 %v720
          %v725 = vand.u32 2147483647, %v721
          %vm726 = vcmp.gt.f32.partialorder %v725, 29.0
          %vm727 = vcmp.ne.f32.partialorder %v721, %v721
          %v728 = vmul.f32 %v721, 16.0
          %v729 = vsel %vm727, -0.0, %v728
          %v730 = vsel %vm726, nan, %v729
          %v731 = vand.u32 2147483647, %v722
          %vm732 = vcmp.gt.f32.partialorder %v731, 29.0
          %vm733 = vcmp.ne.f32.partialorder %v722, %v722
          %v734 = vmul.f32 %v722, 16.0
          %v735 = vsel %vm733, -0.0, %v734
          %v736 = vsel %vm732, nan, %v735
          %v737 = vand.u32 2147483647, %v723
          %vm738 = vcmp.gt.f32.partialorder %v737, 29.0
          %vm739 = vcmp.ne.f32.partialorder %v723, %v723
          %v740 = vmul.f32 %v723, 16.0
          %v741 = vsel %vm739, -0.0, %v740
          %v742 = vsel %vm738, nan, %v741
          %v743 = vand.u32 2147483647, %v724
          %vm744 = vcmp.gt.f32.partialorder %v743, 29.0
          %vm745 = vcmp.ne.f32.partialorder %v724, %v724
          %v746 = vmul.f32 %v724, 16.0
          %v747 = vsel %vm745, -0.0, %v746
          %v748 = vsel %vm744, nan, %v747
        $region56: #{deepgemm_linear.1} parent=31
          #allocation23 [shape = 'u8[4096]{0}', space=vmem, size = 0x1000, scoped, tag = 'scoped memory for deepgemm_linear.1']
          %749 = vst [vmem:[#allocation23] sm:$0xff] %v287
          %s750 = scalar_lea.vmem [#allocation23], 6
          %v751 = vld [vmem:[%s750] sm:$0x3]
          %v752 = vunpack.c.0.f8e4m3b11 %v751
          %v753 = vunpack.c.1.f8e4m3b11 %v751
          %v754 = vunpack.c.2.f8e4m3b11 %v751
          %v755 = vunpack.c.3.f8e4m3b11 %v751
          %v756 = vand.u32 2147483647, %v752
          %vm757 = vcmp.gt.f32.partialorder %v756, 29.0
          %vm758 = vcmp.ne.f32.partialorder %v752, %v752
          %v759 = vmul.f32 %v752, 16.0
          %v760 = vsel %vm758, -0.0, %v759
          %v761 = vsel %vm757, nan, %v760
          %v762 = vand.u32 2147483647, %v753
          %vm763 = vcmp.gt.f32.partialorder %v762, 29.0
          %vm764 = vcmp.ne.f32.partialorder %v753, %v753
          %v765 = vmul.f32 %v753, 16.0
          %v766 = vsel %vm764, -0.0, %v765
          %v767 = vsel %vm763, nan, %v766
          %v768 = vand.u32 2147483647, %v754
          %vm769 = vcmp.gt.f32.partialorder %v768, 29.0
          %vm770 = vcmp.ne.f32.partialorder %v754, %v754
          %v771 = vmul.f32 %v754, 16.0
          %v772 = vsel %vm770, -0.0, %v771
          %v773 = vsel %vm769, nan, %v772
          %v774 = vand.u32 2147483647, %v755
          %vm775 = vcmp.gt.f32.partialorder %v774, 29.0
          %vm776 = vcmp.ne.f32.partialorder %v755, %v755
          %v777 = vmul.f32 %v755, 16.0
          %v778 = vsel %vm776, -0.0, %v777
          %v779 = vsel %vm775, nan, %v778
        %v780 = vpack.c.bf16 %v330, %v299
        %v781 = vpack.c.bf16 %v392, %v361
        %v782 = vpack.c.bf16 %v453, %v422
        %v783 = vpack.c.bf16 %v515, %v484
        %v784 = vpack.c.bf16 %v576, %v545
        %v785 = vpack.c.bf16 %v638, %v607
        %v786 = vpack.c.bf16 %v699, %v668
        %v787 = vpack.c.bf16 %v761, %v730
        %v790 = vunpack.c.l.b16 %v282
        %v791 = vunpack.c.l.b16 %v283
        %v792 = vpack.c.b16 %v791, %v790
        %794 = vmatprep.subr.bf16.mxu0 0
        %795 = vmatpush1.bf16.msra.mxu0 %v787
        %796 = vmatprep.subr.bf16.mxu0 0
        %797 = vmatpush1.bf16.msra.mxu0 %v786
        %798 = vmatprep.subr.bf16.mxu0 0
        %799 = vmatpush1.bf16.msra.mxu0 %v785
        %800 = vmatprep.subr.bf16.mxu0 0
        %801 = vmatpush1.bf16.msra.mxu0 %v784
        %802 = vmatprep.subr.bf16.mxu0 0
        %803 = vmatpush1.bf16.msra.mxu0 %v783
        %804 = vmatprep.subr.bf16.mxu0 0
        %805 = vmatpush1.bf16.msra.mxu0 %v782
        %806 = vmatprep.subr.bf16.mxu0 0
        %807 = vmatpush1.bf16.msra.mxu0 %v781
        %808 = vmatprep.subr.bf16.mxu0 0
        %809 = vmatpush1.bf16.msra.mxu0 %v780
        %810 = vmatprep.subr.bf16.mxu0 0
        %811 = vmatpush2.bf16.msra.mxu0 0
        %812 = vmatprep.subr.bf16.mxu0 0
        %813 = vmatpush2.bf16.msra.mxu0 0
        %814 = vmatprep.subr.bf16.mxu0 0
        %815 = vmatpush2.bf16.msra.mxu0 0
        %816 = vmatprep.subr.bf16.mxu0 0
        %817 = vmatpush2.bf16.msra.mxu0 0
        %818 = vmatprep.subr.bf16.mxu0 0
        %819 = vmatpush2.bf16.msra.mxu0 0
        %820 = vmatprep.subr.bf16.mxu0 0
        %821 = vmatpush2.bf16.msra.mxu0 0
        %822 = vmatprep.subr.bf16.mxu0 0
        %823 = vmatpush2.bf16.msra.mxu0 0
        %824 = vmatprep.subr.bf16.mxu0 0
        %825 = vmatpush2.bf16.msra.mxu0 0
        %826 = vmatprep.mubr.bf16.mxu0 0
        %827 = vmatmul.mubr.bf16.gmra.mxu0 %v792
        %v828 = vpop.f32.mrf.mxu0
        %v829 = vadd.f32 0.0, %v828
        %v830 = vpop.f32.mrf.mxu0
        %v831 = vpop.f32.mrf.mxu0
        %v832 = vadd.f32 0.0, %v831
        %v833 = vpop.f32.mrf.mxu0
        %834 = vdwg.mxu0
        %s835 = smul.u32 %s30, 2
        %s836 = sadd.s32 %s835, %s281
        %s837 = sld [smem:[#allocation4 + %s836]]
        %v838 = vld [vmem:[#allocation2] sm:$0xff]
        %v839 = vld [vmem:[#allocation2 + $0x8] sm:$0xff]
        %v840 = vstv %s837
        %v841 = vmul.f32 %v840, %v829
        %v842 = vmul.f32 %v840, %v832
        %v843 = vadd.f32 %v838, %v841
        %v844 = vadd.f32 %v839, %v842
        %845 = vst [vmem:[#allocation2] sm:$0xff] %v843
        %846 = vst [vmem:[#allocation2 + $0x8] sm:$0xff] %v844
        %s847 = sadd.s32 %s281, 1
        %v848 = vld [vmem:[%s266 + $0x4] sm:$0xf]
        %v849 = vld [vmem:[%s266 + $0xc] sm:$0xf]
        %v850 = vld [vmem:[%s222 + $0x20] sm:$0xff]
        %v851 = vld [vmem:[%s222 + $0x28] sm:$0xff]
        %v852 = vld [vmem:[%s222 + $0x30] sm:$0xff]
        %v853 = vld [vmem:[%s222 + $0x38] sm:$0xff]
        $region57: #{deepgemm_linear.1} parent=31
          #allocation24 [shape = 'u8[4096]{0}', space=vmem, size = 0x1000, scoped, tag = 'scoped memory for deepgemm_linear.1']
          %854 = vst [vmem:[#allocation24] sm:$0xff] %v850
          %v855 = vld [vmem:[#allocation24] sm:$0x3]
          %v856 = vunpack.c.0.f8e4m3b11 %v855
          %v857 = vunpack.c.1.f8e4m3b11 %v855
          %v858 = vunpack.c.2.f8e4m3b11 %v855
          %v859 = vunpack.c.3.f8e4m3b11 %v855
          %v860 = vand.u32 2147483647, %v856
          %vm861 = vcmp.gt.f32.partialorder %v860, 29.0
          %vm862 = vcmp.ne.f32.partialorder %v856, %v856
          %v863 = vmul.f32 %v856, 16.0
          %v864 = vsel %vm862, -0.0, %v863
          %v865 = vsel %vm861, nan, %v864
          %v866 = vand.u32 2147483647, %v857
          %vm867 = vcmp.gt.f32.partialorder %v866, 29.0
          %vm868 = vcmp.ne.f32.partialorder %v857, %v857
          %v869 = vmul.f32 %v857, 16.0
          %v870 = vsel %vm868, -0.0, %v869
          %v871 = vsel %vm867, nan, %v870
          %v872 = vand.u32 2147483647, %v858
          %vm873 = vcmp.gt.f32.partialorder %v872, 29.0
          %vm874 = vcmp.ne.f32.partialorder %v858, %v858
          %v875 = vmul.f32 %v858, 16.0
          %v876 = vsel %vm874, -0.0, %v875
          %v877 = vsel %vm873, nan, %v876
          %v878 = vand.u32 2147483647, %v859
          %vm879 = vcmp.gt.f32.partialorder %v878, 29.0
          %vm880 = vcmp.ne.f32.partialorder %v859, %v859
          %v881 = vmul.f32 %v859, 16.0
          %v882 = vsel %vm880, -0.0, %v881
          %v883 = vsel %vm879, nan, %v882
        $region58: #{deepgemm_linear.1} parent=31
          #allocation25 [shape = 'u8[4096]{0}', space=vmem, size = 0x1000, scoped, tag = 'scoped memory for deepgemm_linear.1']
          %884 = vst [vmem:[#allocation25] sm:$0xff] %v850
          %s885 = scalar_lea.vmem [#allocation25], 2
          %v886 = vld [vmem:[%s885] sm:$0x3]
          %v887 = vunpack.c.0.f8e4m3b11 %v886
          %v888 = vunpack.c.1.f8e4m3b11 %v886
          %v889 = vunpack.c.2.f8e4m3b11 %v886
          %v890 = vunpack.c.3.f8e4m3b11 %v886
          %v891 = vand.u32 2147483647, %v887
          %vm892 = vcmp.gt.f32.partialorder %v891, 29.0
          %vm893 = vcmp.ne.f32.partialorder %v887, %v887
          %v894 = vmul.f32 %v887, 16.0
          %v895 = vsel %vm893, -0.0, %v894
          %v896 = vsel %vm892, nan, %v895
          %v897 = vand.u32 2147483647, %v888
          %vm898 = vcmp.gt.f32.partialorder %v897, 29.0
          %vm899 = vcmp.ne.f32.partialorder %v888, %v888
          %v900 = vmul.f32 %v888, 16.0
          %v901 = vsel %vm899, -0.0, %v900
          %v902 = vsel %vm898, nan, %v901
          %v903 = vand.u32 2147483647, %v889
          %vm904 = vcmp.gt.f32.partialorder %v903, 29.0
          %vm905 = vcmp.ne.f32.partialorder %v889, %v889
          %v906 = vmul.f32 %v889, 16.0
          %v907 = vsel %vm905, -0.0, %v906
          %v908 = vsel %vm904, nan, %v907
          %v909 = vand.u32 2147483647, %v890
          %vm910 = vcmp.gt.f32.partialorder %v909, 29.0
          %vm911 = vcmp.ne.f32.partialorder %v890, %v890
          %v912 = vmul.f32 %v890, 16.0
          %v913 = vsel %vm911, -0.0, %v912
          %v914 = vsel %vm910, nan, %v913
        $region59: #{deepgemm_linear.1} parent=31
          #allocation26 [shape = 'u8[4096]{0}', space=vmem, size = 0x1000, scoped, tag = 'scoped memory for deepgemm_linear.1']
          %915 = vst [vmem:[#allocation26] sm:$0xff] %v850
          %s916 = scalar_lea.vmem [#allocation26], 4
          %v917 = vld [vmem:[%s916] sm:$0x3]
          %v918 = vunpack.c.0.f8e4m3b11 %v917
          %v919 = vunpack.c.1.f8e4m3b11 %v917
          %v920 = vunpack.c.2.f8e4m3b11 %v917
          %v921 = vunpack.c.3.f8e4m3b11 %v917
          %v922 = vand.u32 2147483647, %v918
          %vm923 = vcmp.gt.f32.partialorder %v922, 29.0
          %vm924 = vcmp.ne.f32.partialorder %v918, %v918
          %v925 = vmul.f32 %v918, 16.0
          %v926 = vsel %vm924, -0.0, %v925
          %v927 = vsel %vm923, nan, %v926
          %v928 = vand.u32 2147483647, %v919
          %vm929 = vcmp.gt.f32.partialorder %v928, 29.0
          %vm930 = vcmp.ne.f32.partialorder %v919, %v919
          %v931 = vmul.f32 %v919, 16.0
          %v932 = vsel %vm930, -0.0, %v931
          %v933 = vsel %vm929, nan, %v932
          %v934 = vand.u32 2147483647, %v920
          %vm935 = vcmp.gt.f32.partialorder %v934, 29.0
          %vm936 = vcmp.ne.f32.partialorder %v920, %v920
          %v937 = vmul.f32 %v920, 16.0
          %v938 = vsel %vm936, -0.0, %v937
          %v939 = vsel %vm935, nan, %v938
          %v940 = vand.u32 2147483647, %v921
          %vm941 = vcmp.gt.f32.partialorder %v940, 29.0
          %vm942 = vcmp.ne.f32.partialorder %v921, %v921
          %v943 = vmul.f32 %v921, 16.0
          %v944 = vsel %vm942, -0.0, %v943
          %v945 = vsel %vm941, nan, %v944
        $region60: #{deepgemm_linear.1} parent=31
          #allocation27 [shape = 'u8[4096]{0}', space=vmem, size = 0x1000, scoped, tag = 'scoped memory for deepgemm_linear.1']
          %946 = vst [vmem:[#allocation27] sm:$0xff] %v850
          %s947 = scalar_lea.vmem [#allocation27], 6
          %v948 = vld [vmem:[%s947] sm:$0x3]
          %v949 = vunpack.c.0.f8e4m3b11 %v948
          %v950 = vunpack.c.1.f8e4m3b11 %v948
          %v951 = vunpack.c.2.f8e4m3b11 %v948
          %v952 = vunpack.c.3.f8e4m3b11 %v948
          %v953 = vand.u32 2147483647, %v949
          %vm954 = vcmp.gt.f32.partialorder %v953, 29.0
          %vm955 = vcmp.ne.f32.partialorder %v949, %v949
          %v956 = vmul.f32 %v949, 16.0
          %v957 = vsel %vm955, -0.0, %v956
          %v958 = vsel %vm954, nan, %v957
          %v959 = vand.u32 2147483647, %v950
          %vm960 = vcmp.gt.f32.partialorder %v959, 29.0
          %vm961 = vcmp.ne.f32.partialorder %v950, %v950
          %v962 = vmul.f32 %v950, 16.0
          %v963 = vsel %vm961, -0.0, %v962
          %v964 = vsel %vm960, nan, %v963
          %v965 = vand.u32 2147483647, %v951
          %vm966 = vcmp.gt.f32.partialorder %v965, 29.0
          %vm967 = vcmp.ne.f32.partialorder %v951, %v951
          %v968 = vmul.f32 %v951, 16.0
          %v969 = vsel %vm967, -0.0, %v968
          %v970 = vsel %vm966, nan, %v969
          %v971 = vand.u32 2147483647, %v952
          %vm972 = vcmp.gt.f32.partialorder %v971, 29.0
          %vm973 = vcmp.ne.f32.partialorder %v952, %v952
          %v974 = vmul.f32 %v952, 16.0
          %v975 = vsel %vm973, -0.0, %v974
          %v976 = vsel %vm972, nan, %v975
        $region61: #{deepgemm_linear.1} parent=31
          #allocation28 [shape = 'u8[4096]{0}', space=vmem, size = 0x1000, scoped, tag = 'scoped memory for deepgemm_linear.1']
          %977 = vst [vmem:[#allocation28] sm:$0xff] %v851
          %v978 = vld [vmem:[#allocation28] sm:$0x3]
          %v979 = vunpack.c.0.f8e4m3b11 %v978
          %v980 = vunpack.c.1.f8e4m3b11 %v978
          %v981 = vunpack.c.2.f8e4m3b11 %v978
          %v982 = vunpack.c.3.f8e4m3b11 %v978
          %v983 = vand.u32 2147483647, %v979
          %vm984 = vcmp.gt.f32.partialorder %v983, 29.0
          %vm985 = vcmp.ne.f32.partialorder %v979, %v979
          %v986 = vmul.f32 %v979, 16.0
          %v987 = vsel %vm985, -0.0, %v986
          %v988 = vsel %vm984, nan, %v987
          %v989 = vand.u32 2147483647, %v980
          %vm990 = vcmp.gt.f32.partialorder %v989, 29.0
          %vm991 = vcmp.ne.f32.partialorder %v980, %v980
          %v992 = vmul.f32 %v980, 16.0
          %v993 = vsel %vm991, -0.0, %v992
          %v994 = vsel %vm990, nan, %v993
          %v995 = vand.u32 2147483647, %v981
          %vm996 = vcmp.gt.f32.partialorder %v995, 29.0
          %vm997 = vcmp.ne.f32.partialorder %v981, %v981
          %v998 = vmul.f32 %v981, 16.0
          %v999 = vsel %vm997, -0.0, %v998
          %v1000 = vsel %vm996, nan, %v999
          %v1001 = vand.u32 2147483647, %v982
          %vm1002 = vcmp.gt.f32.partialorder %v1001, 29.0
          %vm1003 = vcmp.ne.f32.partialorder %v982, %v982
          %v1004 = vmul.f32 %v982, 16.0
          %v1005 = vsel %vm1003, -0.0, %v1004
          %v1006 = vsel %vm1002, nan, %v1005
        $region62: #{deepgemm_linear.1} parent=31
          #allocation29 [shape = 'u8[4096]{0}', space=vmem, size = 0x1000, scoped, tag = 'scoped memory for deepgemm_linear.1']
          %1007 = vst [vmem:[#allocation29] sm:$0xff] %v851
          %s1008 = scalar_lea.vmem [#allocation29], 2
          %v1009 = vld [vmem:[%s1008] sm:$0x3]
          %v1010 = vunpack.c.0.f8e4m3b11 %v1009
          %v1011 = vunpack.c.1.f8e4m3b11 %v1009
          %v1012 = vunpack.c.2.f8e4m3b11 %v1009
          %v1013 = vunpack.c.3.f8e4m3b11 %v1009
          %v1014 = vand.u32 2147483647, %v1010
          %vm1015 = vcmp.gt.f32.partialorder %v1014, 29.0
          %vm1016 = vcmp.ne.f32.partialorder %v1010, %v1010
          %v1017 = vmul.f32 %v1010, 16.0
          %v1018 = vsel %vm1016, -0.0, %v1017
          %v1019 = vsel %vm1015, nan, %v1018
          %v1020 = vand.u32 2147483647, %v1011
          %vm1021 = vcmp.gt.f32.partialorder %v1020, 29.0
          %vm1022 = vcmp.ne.f32.partialorder %v1011, %v1011
          %v1023 = vmul.f32 %v1011, 16.0
          %v1024 = vsel %vm1022, -0.0, %v1023
          %v1025 = vsel %vm1021, nan, %v1024
          %v1026 = vand.u32 2147483647, %v1012
          %vm1027 = vcmp.gt.f32.partialorder %v1026, 29.0
          %vm1028 = vcmp.ne.f32.partialorder %v1012, %v1012
          %v1029 = vmul.f32 %v1012, 16.0
          %v1030 = vsel %vm1028, -0.0, %v1029
          %v1031 = vsel %vm1027, nan, %v1030
          %v1032 = vand.u32 2147483647, %v1013
          %vm1033 = vcmp.gt.f32.partialorder %v1032, 29.0
          %vm1034 = vcmp.ne.f32.partialorder %v1013, %v1013
          %v1035 = vmul.f32 %v1013, 16.0
          %v1036 = vsel %vm1034, -0.0, %v1035
          %v1037 = vsel %vm1033, nan, %v1036
        $region63: #{deepgemm_linear.1} parent=31
          #allocation30 [shape = 'u8[4096]{0}', space=vmem, size = 0x1000, scoped, tag = 'scoped memory for deepgemm_linear.1']
          %1038 = vst [vmem:[#allocation30] sm:$0xff] %v851
          %s1039 = scalar_lea.vmem [#allocation30], 4
          %v1040 = vld [vmem:[%s1039] sm:$0x3]
          %v1041 = vunpack.c.0.f8e4m3b11 %v1040
          %v1042 = vunpack.c.1.f8e4m3b11 %v1040
          %v1043 = vunpack.c.2.f8e4m3b11 %v1040
          %v1044 = vunpack.c.3.f8e4m3b11 %v1040
          %v1045 = vand.u32 2147483647, %v1041
          %vm1046 = vcmp.gt.f32.partialorder %v1045, 29.0
          %vm1047 = vcmp.ne.f32.partialorder %v1041, %v1041
          %v1048 = vmul.f32 %v1041, 16.0
          %v1049 = vsel %vm1047, -0.0, %v1048
          %v1050 = vsel %vm1046, nan, %v1049
          %v1051 = vand.u32 2147483647, %v1042
          %vm1052 = vcmp.gt.f32.partialorder %v1051, 29.0
          %vm1053 = vcmp.ne.f32.partialorder %v1042, %v1042
          %v1054 = vmul.f32 %v1042, 16.0
          %v1055 = vsel %vm1053, -0.0, %v1054
          %v1056 = vsel %vm1052, nan, %v1055
          %v1057 = vand.u32 2147483647, %v1043
          %vm1058 = vcmp.gt.f32.partialorder %v1057, 29.0
          %vm1059 = vcmp.ne.f32.partialorder %v1043, %v1043
          %v1060 = vmul.f32 %v1043, 16.0
          %v1061 = vsel %vm1059, -0.0, %v1060
          %v1062 = vsel %vm1058, nan, %v1061
          %v1063 = vand.u32 2147483647, %v1044
          %vm1064 = vcmp.gt.f32.partialorder %v1063, 29.0
          %vm1065 = vcmp.ne.f32.partialorder %v1044, %v1044
          %v1066 = vmul.f32 %v1044, 16.0
          %v1067 = vsel %vm1065, -0.0, %v1066
          %v1068 = vsel %vm1064, nan, %v1067
        $region64: #{deepgemm_linear.1} parent=31
          #allocation31 [shape = 'u8[4096]{0}', space=vmem, size = 0x1000, scoped, tag = 'scoped memory for deepgemm_linear.1']
          %1069 = vst [vmem:[#allocation31] sm:$0xff] %v851
          %s1070 = scalar_lea.vmem [#allocation31], 6
          %v1071 = vld [vmem:[%s1070] sm:$0x3]
          %v1072 = vunpack.c.0.f8e4m3b11 %v1071
          %v1073 = vunpack.c.1.f8e4m3b11 %v1071
          %v1074 = vunpack.c.2.f8e4m3b11 %v1071
          %v1075 = vunpack.c.3.f8e4m3b11 %v1071
          %v1076 = vand.u32 2147483647, %v1072
          %vm1077 = vcmp.gt.f32.partialorder %v1076, 29.0
          %vm1078 = vcmp.ne.f32.partialorder %v1072, %v1072
          %v1079 = vmul.f32 %v1072, 16.0
          %v1080 = vsel %vm1078, -0.0, %v1079
          %v1081 = vsel %vm1077, nan, %v1080
          %v1082 = vand.u32 2147483647, %v1073
          %vm1083 = vcmp.gt.f32.partialorder %v1082, 29.0
          %vm1084 = vcmp.ne.f32.partialorder %v1073, %v1073
          %v1085 = vmul.f32 %v1073, 16.0
          %v1086 = vsel %vm1084, -0.0, %v1085
          %v1087 = vsel %vm1083, nan, %v1086
          %v1088 = vand.u32 2147483647, %v1074
          %vm1089 = vcmp.gt.f32.partialorder %v1088, 29.0
          %vm1090 = vcmp.ne.f32.partialorder %v1074, %v1074
          %v1091 = vmul.f32 %v1074, 16.0
          %v1092 = vsel %vm1090, -0.0, %v1091
          %v1093 = vsel %vm1089, nan, %v1092
          %v1094 = vand.u32 2147483647, %v1075
          %vm1095 = vcmp.gt.f32.partialorder %v1094, 29.0
          %vm1096 = vcmp.ne.f32.partialorder %v1075, %v1075
          %v1097 = vmul.f32 %v1075, 16.0
          %v1098 = vsel %vm1096, -0.0, %v1097
          %v1099 = vsel %vm1095, nan, %v1098
        $region65: #{deepgemm_linear.1} parent=31
          #allocation32 [shape = 'u8[4096]{0}', space=vmem, size = 0x1000, scoped, tag = 'scoped memory for deepgemm_linear.1']
          %1100 = vst [vmem:[#allocation32] sm:$0xff] %v852
          %v1101 = vld [vmem:[#allocation32] sm:$0x3]
          %v1102 = vunpack.c.0.f8e4m3b11 %v1101
          %v1103 = vunpack.c.1.f8e4m3b11 %v1101
          %v1104 = vunpack.c.2.f8e4m3b11 %v1101
          %v1105 = vunpack.c.3.f8e4m3b11 %v1101
          %v1106 = vand.u32 2147483647, %v1102
          %vm1107 = vcmp.gt.f32.partialorder %v1106, 29.0
          %vm1108 = vcmp.ne.f32.partialorder %v1102, %v1102
          %v1109 = vmul.f32 %v1102, 16.0
          %v1110 = vsel %vm1108, -0.0, %v1109
          %v1111 = vsel %vm1107, nan, %v1110
          %v1112 = vand.u32 2147483647, %v1103
          %vm1113 = vcmp.gt.f32.partialorder %v1112, 29.0
          %vm1114 = vcmp.ne.f32.partialorder %v1103, %v1103
          %v1115 = vmul.f32 %v1103, 16.0
          %v1116 = vsel %vm1114, -0.0, %v1115
          %v1117 = vsel %vm1113, nan, %v1116
          %v1118 = vand.u32 2147483647, %v1104
          %vm1119 = vcmp.gt.f32.partialorder %v1118, 29.0
          %vm1120 = vcmp.ne.f32.partialorder %v1104, %v1104
          %v1121 = vmul.f32 %v1104, 16.0
          %v1122 = vsel %vm1120, -0.0, %v1121
          %v1123 = vsel %vm1119, nan, %v1122
          %v1124 = vand.u32 2147483647, %v1105
          %vm1125 = vcmp.gt.f32.partialorder %v1124, 29.0
          %vm1126 = vcmp.ne.f32.partialorder %v1105, %v1105
          %v1127 = vmul.f32 %v1105, 16.0
          %v1128 = vsel %vm1126, -0.0, %v1127
          %v1129 = vsel %vm1125, nan, %v1128
        $region66: #{deepgemm_linear.1} parent=31
          #allocation33 [shape = 'u8[4096]{0}', space=vmem, size = 0x1000, scoped, tag = 'scoped memory for deepgemm_linear.1']
          %1130 = vst [vmem:[#allocation33] sm:$0xff] %v852
          %s1131 = scalar_lea.vmem [#allocation33], 2
          %v1132 = vld [vmem:[%s1131] sm:$0x3]
          %v1133 = vunpack.c.0.f8e4m3b11 %v1132
          %v1134 = vunpack.c.1.f8e4m3b11 %v1132
          %v1135 = vunpack.c.2.f8e4m3b11 %v1132
          %v1136 = vunpack.c.3.f8e4m3b11 %v1132
          %v1137 = vand.u32 2147483647, %v1133
          %vm1138 = vcmp.gt.f32.partialorder %v1137, 29.0
          %vm1139 = vcmp.ne.f32.partialorder %v1133, %v1133
          %v1140 = vmul.f32 %v1133, 16.0
          %v1141 = vsel %vm1139, -0.0, %v1140
          %v1142 = vsel %vm1138, nan, %v1141
          %v1143 = vand.u32 2147483647, %v1134
          %vm1144 = vcmp.gt.f32.partialorder %v1143, 29.0
          %vm1145 = vcmp.ne.f32.partialorder %v1134, %v1134
          %v1146 = vmul.f32 %v1134, 16.0
          %v1147 = vsel %vm1145, -0.0, %v1146
          %v1148 = vsel %vm1144, nan, %v1147
          %v1149 = vand.u32 2147483647, %v1135
          %vm1150 = vcmp.gt.f32.partialorder %v1149, 29.0
          %vm1151 = vcmp.ne.f32.partialorder %v1135, %v1135
          %v1152 = vmul.f32 %v1135, 16.0
          %v1153 = vsel %vm1151, -0.0, %v1152
          %v1154 = vsel %vm1150, nan, %v1153
          %v1155 = vand.u32 2147483647, %v1136
          %vm1156 = vcmp.gt.f32.partialorder %v1155, 29.0
          %vm1157 = vcmp.ne.f32.partialorder %v1136, %v1136
          %v1158 = vmul.f32 %v1136, 16.0
          %v1159 = vsel %vm1157, -0.0, %v1158
          %v1160 = vsel %vm1156, nan, %v1159
        $region67: #{deepgemm_linear.1} parent=31
          #allocation34 [shape = 'u8[4096]{0}', space=vmem, size = 0x1000, scoped, tag = 'scoped memory for deepgemm_linear.1']
          %1161 = vst [vmem:[#allocation34] sm:$0xff] %v852
          %s1162 = scalar_lea.vmem [#allocation34], 4
          %v1163 = vld [vmem:[%s1162] sm:$0x3]
          %v1164 = vunpack.c.0.f8e4m3b11 %v1163
          %v1165 = vunpack.c.1.f8e4m3b11 %v1163
          %v1166 = vunpack.c.2.f8e4m3b11 %v1163
          %v1167 = vunpack.c.3.f8e4m3b11 %v1163
          %v1168 = vand.u32 2147483647, %v1164
          %vm1169 = vcmp.gt.f32.partialorder %v1168, 29.0
          %vm1170 = vcmp.ne.f32.partialorder %v1164, %v1164
          %v1171 = vmul.f32 %v1164, 16.0
          %v1172 = vsel %vm1170, -0.0, %v1171
          %v1173 = vsel %vm1169, nan, %v1172
          %v1174 = vand.u32 2147483647, %v1165
          %vm1175 = vcmp.gt.f32.partialorder %v1174, 29.0
          %vm1176 = vcmp.ne.f32.partialorder %v1165, %v1165
          %v1177 = vmul.f32 %v1165, 16.0
          %v1178 = vsel %vm1176, -0.0, %v1177
          %v1179 = vsel %vm1175, nan, %v1178
          %v1180 = vand.u32 2147483647, %v1166
          %vm1181 = vcmp.gt.f32.partialorder %v1180, 29.0
          %vm1182 = vcmp.ne.f32.partialorder %v1166, %v1166
          %v1183 = vmul.f32 %v1166, 16.0
          %v1184 = vsel %vm1182, -0.0, %v1183
          %v1185 = vsel %vm1181, nan, %v1184
          %v1186 = vand.u32 2147483647, %v1167
          %vm1187 = vcmp.gt.f32.partialorder %v1186, 29.0
          %vm1188 = vcmp.ne.f32.partialorder %v1167, %v1167
          %v1189 = vmul.f32 %v1167, 16.0
          %v1190 = vsel %vm1188, -0.0, %v1189
          %v1191 = vsel %vm1187, nan, %v1190
        $region68: #{deepgemm_linear.1} parent=31
          #allocation35 [shape = 'u8[4096]{0}', space=vmem, size = 0x1000, scoped, tag = 'scoped memory for deepgemm_linear.1']
          %1192 = vst [vmem:[#allocation35] sm:$0xff] %v852
          %s1193 = scalar_lea.vmem [#allocation35], 6
          %v1194 = vld [vmem:[%s1193] sm:$0x3]
          %v1195 = vunpack.c.0.f8e4m3b11 %v1194
          %v1196 = vunpack.c.1.f8e4m3b11 %v1194
          %v1197 = vunpack.c.2.f8e4m3b11 %v1194
          %v1198 = vunpack.c.3.f8e4m3b11 %v1194
          %v1199 = vand.u32 2147483647, %v1195
          %vm1200 = vcmp.gt.f32.partialorder %v1199, 29.0
          %vm1201 = vcmp.ne.f32.partialorder %v1195, %v1195
          %v1202 = vmul.f32 %v1195, 16.0
          %v1203 = vsel %vm1201, -0.0, %v1202
          %v1204 = vsel %vm1200, nan, %v1203
          %v1205 = vand.u32 2147483647, %v1196
          %vm1206 = vcmp.gt.f32.partialorder %v1205, 29.0
          %vm1207 = vcmp.ne.f32.partialorder %v1196, %v1196
          %v1208 = vmul.f32 %v1196, 16.0
          %v1209 = vsel %vm1207, -0.0, %v1208
          %v1210 = vsel %vm1206, nan, %v1209
          %v1211 = vand.u32 2147483647, %v1197
          %vm1212 = vcmp.gt.f32.partialorder %v1211, 29.0
          %vm1213 = vcmp.ne.f32.partialorder %v1197, %v1197
          %v1214 = vmul.f32 %v1197, 16.0
          %v1215 = vsel %vm1213, -0.0, %v1214
          %v1216 = vsel %vm1212, nan, %v1215
          %v1217 = vand.u32 2147483647, %v1198
          %vm1218 = vcmp.gt.f32.partialorder %v1217, 29.0
          %vm1219 = vcmp.ne.f32.partialorder %v1198, %v1198
          %v1220 = vmul.f32 %v1198, 16.0
          %v1221 = vsel %vm1219, -0.0, %v1220
          %v1222 = vsel %vm1218, nan, %v1221
        $region69: #{deepgemm_linear.1} parent=31
          #allocation36 [shape = 'u8[4096]{0}', space=vmem, size = 0x1000, scoped, tag = 'scoped memory for deepgemm_linear.1']
          %1223 = vst [vmem:[#allocation36] sm:$0xff] %v853
          %v1224 = vld [vmem:[#allocation36] sm:$0x3]
          %v1225 = vunpack.c.0.f8e4m3b11 %v1224
          %v1226 = vunpack.c.1.f8e4m3b11 %v1224
          %v1227 = vunpack.c.2.f8e4m3b11 %v1224
          %v1228 = vunpack.c.3.f8e4m3b11 %v1224
          %v1229 = vand.u32 2147483647, %v1225
          %vm1230 = vcmp.gt.f32.partialorder %v1229, 29.0
          %vm1231 = vcmp.ne.f32.partialorder %v1225, %v1225
          %v1232 = vmul.f32 %v1225, 16.0
          %v1233 = vsel %vm1231, -0.0, %v1232
          %v1234 = vsel %vm1230, nan, %v1233
          %v1235 = vand.u32 2147483647, %v1226
          %vm1236 = vcmp.gt.f32.partialorder %v1235, 29.0
          %vm1237 = vcmp.ne.f32.partialorder %v1226, %v1226
          %v1238 = vmul.f32 %v1226, 16.0
          %v1239 = vsel %vm1237, -0.0, %v1238
          %v1240 = vsel %vm1236, nan, %v1239
          %v1241 = vand.u32 2147483647, %v1227
          %vm1242 = vcmp.gt.f32.partialorder %v1241, 29.0
          %vm1243 = vcmp.ne.f32.partialorder %v1227, %v1227
          %v1244 = vmul.f32 %v1227, 16.0
          %v1245 = vsel %vm1243, -0.0, %v1244
          %v1246 = vsel %vm1242, nan, %v1245
          %v1247 = vand.u32 2147483647, %v1228
          %vm1248 = vcmp.gt.f32.partialorder %v1247, 29.0
          %vm1249 = vcmp.ne.f32.partialorder %v1228, %v1228
          %v1250 = vmul.f32 %v1228, 16.0
          %v1251 = vsel %vm1249, -0.0, %v1250
          %v1252 = vsel %vm1248, nan, %v1251
        $region70: #{deepgemm_linear.1} parent=31
          #allocation37 [shape = 'u8[4096]{0}', space=vmem, size = 0x1000, scoped, tag = 'scoped memory for deepgemm_linear.1']
          %1253 = vst [vmem:[#allocation37] sm:$0xff] %v853
          %s1254 = scalar_lea.vmem [#allocation37], 2
          %v1255 = vld [vmem:[%s1254] sm:$0x3]
          %v1256 = vunpack.c.0.f8e4m3b11 %v1255
          %v1257 = vunpack.c.1.f8e4m3b11 %v1255
          %v1258 = vunpack.c.2.f8e4m3b11 %v1255
          %v1259 = vunpack.c.3.f8e4m3b11 %v1255
          %v1260 = vand.u32 2147483647, %v1256
          %vm1261 = vcmp.gt.f32.partialorder %v1260, 29.0
          %vm1262 = vcmp.ne.f32.partialorder %v1256, %v1256
          %v1263 = vmul.f32 %v1256, 16.0
          %v1264 = vsel %vm1262, -0.0, %v1263
          %v1265 = vsel %vm1261, nan, %v1264
          %v1266 = vand.u32 2147483647, %v1257
          %vm1267 = vcmp.gt.f32.partialorder %v1266, 29.0
          %vm1268 = vcmp.ne.f32.partialorder %v1257, %v1257
          %v1269 = vmul.f32 %v1257, 16.0
          %v1270 = vsel %vm1268, -0.0, %v1269
          %v1271 = vsel %vm1267, nan, %v1270
          %v1272 = vand.u32 2147483647, %v1258
          %vm1273 = vcmp.gt.f32.partialorder %v1272, 29.0
          %vm1274 = vcmp.ne.f32.partialorder %v1258, %v1258
          %v1275 = vmul.f32 %v1258, 16.0
          %v1276 = vsel %vm1274, -0.0, %v1275
          %v1277 = vsel %vm1273, nan, %v1276
          %v1278 = vand.u32 2147483647, %v1259
          %vm1279 = vcmp.gt.f32.partialorder %v1278, 29.0
          %vm1280 = vcmp.ne.f32.partialorder %v1259, %v1259
          %v1281 = vmul.f32 %v1259, 16.0
          %v1282 = vsel %vm1280, -0.0, %v1281
          %v1283 = vsel %vm1279, nan, %v1282
        $region71: #{deepgemm_linear.1} parent=31
          #allocation38 [shape = 'u8[4096]{0}', space=vmem, size = 0x1000, scoped, tag = 'scoped memory for deepgemm_linear.1']
          %1284 = vst [vmem:[#allocation38] sm:$0xff] %v853
          %s1285 = scalar_lea.vmem [#allocation38], 4
          %v1286 = vld [vmem:[%s1285] sm:$0x3]
          %v1287 = vunpack.c.0.f8e4m3b11 %v1286
          %v1288 = vunpack.c.1.f8e4m3b11 %v1286
          %v1289 = vunpack.c.2.f8e4m3b11 %v1286
          %v1290 = vunpack.c.3.f8e4m3b11 %v1286
          %v1291 = vand.u32 2147483647, %v1287
          %vm1292 = vcmp.gt.f32.partialorder %v1291, 29.0
          %vm1293 = vcmp.ne.f32.partialorder %v1287, %v1287
          %v1294 = vmul.f32 %v1287, 16.0
          %v1295 = vsel %vm1293, -0.0, %v1294
          %v1296 = vsel %vm1292, nan, %v1295
          %v1297 = vand.u32 2147483647, %v1288
          %vm1298 = vcmp.gt.f32.partialorder %v1297, 29.0
          %vm1299 = vcmp.ne.f32.partialorder %v1288, %v1288
          %v1300 = vmul.f32 %v1288, 16.0
          %v1301 = vsel %vm1299, -0.0, %v1300
          %v1302 = vsel %vm1298, nan, %v1301
          %v1303 = vand.u32 2147483647, %v1289
          %vm1304 = vcmp.gt.f32.partialorder %v1303, 29.0
          %vm1305 = vcmp.ne.f32.partialorder %v1289, %v1289
          %v1306 = vmul.f32 %v1289, 16.0
          %v1307 = vsel %vm1305, -0.0, %v1306
          %v1308 = vsel %vm1304, nan, %v1307
          %v1309 = vand.u32 2147483647, %v1290
          %vm1310 = vcmp.gt.f32.partialorder %v1309, 29.0
          %vm1311 = vcmp.ne.f32.partialorder %v1290, %v1290
          %v1312 = vmul.f32 %v1290, 16.0
          %v1313 = vsel %vm1311, -0.0, %v1312
          %v1314 = vsel %vm1310, nan, %v1313
        $region72: #{deepgemm_linear.1} parent=31
          #allocation39 [shape = 'u8[4096]{0}', space=vmem, size = 0x1000, scoped, tag = 'scoped memory for deepgemm_linear.1']
          %1315 = vst [vmem:[#allocation39] sm:$0xff] %v853
          %s1316 = scalar_lea.vmem [#allocation39], 6
          %v1317 = vld [vmem:[%s1316] sm:$0x3]
          %v1318 = vunpack.c.0.f8e4m3b11 %v1317
          %v1319 = vunpack.c.1.f8e4m3b11 %v1317
          %v1320 = vunpack.c.2.f8e4m3b11 %v1317
          %v1321 = vunpack.c.3.f8e4m3b11 %v1317
          %v1322 = vand.u32 2147483647, %v1318
          %vm1323 = vcmp.gt.f32.partialorder %v1322, 29.0
          %vm1324 = vcmp.ne.f32.partialorder %v1318, %v1318
          %v1325 = vmul.f32 %v1318, 16.0
          %v1326 = vsel %vm1324, -0.0, %v1325
          %v1327 = vsel %vm1323, nan, %v1326
          %v1328 = vand.u32 2147483647, %v1319
          %vm1329 = vcmp.gt.f32.partialorder %v1328, 29.0
          %vm1330 = vcmp.ne.f32.partialorder %v1319, %v1319
          %v1331 = vmul.f32 %v1319, 16.0
          %v1332 = vsel %vm1330, -0.0, %v1331
          %v1333 = vsel %vm1329, nan, %v1332
          %v1334 = vand.u32 2147483647, %v1320
          %vm1335 = vcmp.gt.f32.partialorder %v1334, 29.0
          %vm1336 = vcmp.ne.f32.partialorder %v1320, %v1320
          %v1337 = vmul.f32 %v1320, 16.0
          %v1338 = vsel %vm1336, -0.0, %v1337
          %v1339 = vsel %vm1335, nan, %v1338
          %v1340 = vand.u32 2147483647, %v1321
          %vm1341 = vcmp.gt.f32.partialorder %v1340, 29.0
          %vm1342 = vcmp.ne.f32.partialorder %v1321, %v1321
          %v1343 = vmul.f32 %v1321, 16.0
          %v1344 = vsel %vm1342, -0.0, %v1343
          %v1345 = vsel %vm1341, nan, %v1344
        %v1346 = vpack.c.bf16 %v896, %v865
        %v1347 = vpack.c.bf16 %v958, %v927
        %v1348 = vpack.c.bf16 %v1019, %v988
        %v1349 = vpack.c.bf16 %v1081, %v1050
        %v1350 = vpack.c.bf16 %v1142, %v1111
        %v1351 = vpack.c.bf16 %v1204, %v1173
        %v1352 = vpack.c.bf16 %v1265, %v1234
        %v1353 = vpack.c.bf16 %v1327, %v1296
        %v1356 = vunpack.c.l.b16 %v848
        %v1357 = vunpack.c.l.b16 %v849
        %v1358 = vpack.c.b16 %v1357, %v1356
        %1360 = vmatprep.subr.bf16.mxu0 0
        %1361 = vmatpush1.bf16.msra.mxu0 %v1353
        %1362 = vmatprep.subr.bf16.mxu0 0
        %1363 = vmatpush1.bf16.msra.mxu0 %v1352
        %1364 = vmatprep.subr.bf16.mxu0 0
        %1365 = vmatpush1.bf16.msra.mxu0 %v1351
        %1366 = vmatprep.subr.bf16.mxu0 0
        %1367 = vmatpush1.bf16.msra.mxu0 %v1350
        %1368 = vmatprep.subr.bf16.mxu0 0
        %1369 = vmatpush1.bf16.msra.mxu0 %v1349
        %1370 = vmatprep.subr.bf16.mxu0 0
        %1371 = vmatpush1.bf16.msra.mxu0 %v1348
        %1372 = vmatprep.subr.bf16.mxu0 0
        %1373 = vmatpush1.bf16.msra.mxu0 %v1347
        %1374 = vmatprep.subr.bf16.mxu0 0
        %1375 = vmatpush1.bf16.msra.mxu0 %v1346
        %1376 = vmatprep.subr.bf16.mxu0 0
        %1377 = vmatpush2.bf16.msra.mxu0 0
        %1378 = vmatprep.subr.bf16.mxu0 0
        %1379 = vmatpush2.bf16.msra.mxu0 0
        %1380 = vmatprep.subr.bf16.mxu0 0
        %1381 = vmatpush2.bf16.msra.mxu0 0
        %1382 = vmatprep.subr.bf16.mxu0 0
        %1383 = vmatpush2.bf16.msra.mxu0 0
        %1384 = vmatprep.subr.bf16.mxu0 0
        %1385 = vmatpush2.bf16.msra.mxu0 0
        %1386 = vmatprep.subr.bf16.mxu0 0
        %1387 = vmatpush2.bf16.msra.mxu0 0
        %1388 = vmatprep.subr.bf16.mxu0 0
        %1389 = vmatpush2.bf16.msra.mxu0 0
        %1390 = vmatprep.subr.bf16.mxu0 0
        %1391 = vmatpush2.bf16.msra.mxu0 0
        %1392 = vmatprep.mubr.bf16.mxu0 0
        %1393 = vmatmul.mubr.bf16.gmra.mxu0 %v1358
        %v1394 = vpop.f32.mrf.mxu0
        %v1395 = vadd.f32 0.0, %v1394
        %v1396 = vpop.f32.mrf.mxu0
        %v1397 = vpop.f32.mrf.mxu0
        %v1398 = vadd.f32 0.0, %v1397
        %v1399 = vpop.f32.mrf.mxu0
        %1400 = vdwg.mxu0
        %s1401 = sadd.s32 %s835, %s847
        %s1402 = sld [smem:[#allocation4 + %s1401]]
        %v1403 = vld [vmem:[#allocation2] sm:$0xff]
        %v1404 = vld [vmem:[#allocation2 + $0x8] sm:$0xff]
        %v1405 = vstv %s1402
        %v1406 = vmul.f32 %v1405, %v1395
        %v1407 = vmul.f32 %v1405, %v1398
        %v1408 = vadd.f32 %v1403, %v1406
        %v1409 = vadd.f32 %v1404, %v1407
        %1410 = vst [vmem:[#allocation2] sm:$0xff] %v1408
        %1411 = vst [vmem:[#allocation2 + $0x8] sm:$0xff] %v1409
        // Predicated region
        $region73: #{deepgemm_linear.1} parent=31 // pred_check
          %p1412 = pneg %p275
        $region74: #{deepgemm_linear.1} parent=31 // pred_check_branch
          %1414 = sbr.rel (%p1412) target = $region76
        $region75: #{deepgemm_linear.1} parent=31 // pred_region
          %v1415 = vld [vmem:[#allocation2] sm:$0xff]
          %v1416 = vld [vmem:[#allocation2 + $0x8] sm:$0xff]
          %v1417 = vpack.c.bf16 %v1416, %v1415
          %v1418 = vld [vmem:[%s272] sm:$0x1]
          %v1420 = vpack.i.b16 %v1418, %v1418
          %v1422 = vlaneseq
          %v1423 = vshrl.u32 %v1422, 7
          %v1424 = vsub.s32 0, %v1423
          %v1425 = vrot.slane %v1420, %v1424
          %v1426 = vadd.bf16 %v1417, %v1425
          %v1428 = vunpack.c.l.b16 %v1426
          %v1429 = vunpack.c.h.b16 %v1426
          %v1430 = vpack.c.b16 %v1428, %v1428
          %v1431 = vpack.c.b16 %v1429, %v1429
          %1434 = vst [vmem:[%s256] sm:$0xf] %v1430
          %1435 = vst [vmem:[%s256 + $0x4] sm:$0xf] %v1431
        $region76: #{deepgemm_linear.1} parent=31 // pred_fallthru
          _
        %s1436 = sand.u32 %s135, 1
        %s1437 = sand.u32 %s135, 1
        %s1438 = smul.addr %s1437, 8
        %s1439 = scalar_lea.vmem [#allocation7], %s1438
        // Predicated region
        $region77: #{deepgemm_linear.1} parent=31 // pred_check
          %p1440 = pneg %p145
        $region78: #{deepgemm_linear.1} parent=31 // pred_check_branch
          %1442 = sbr.rel (%p1440) target = $region80
        $region79: #{deepgemm_linear.1} parent=31 // pred_region
          %s1443 = smul.u32 2, %s29
          %s1444 = smul.addr %s1443, 2
          %s1445 = sadd.s32 %s30, %s1444
          %s1446 = smul.addr %s1445, 4
          %s1447 = scalar_lea.vmem %s4, %s1446
          // Predicated region
          $region81: #{deepgemm_linear.1} parent=79 // pred_check
            _
          $region82: #{deepgemm_linear.1} parent=79 // pred_check_branch
            %1449 = sbr.rel (0) target = $region84
          $region83: #{deepgemm_linear.1} parent=79 // pred_region
            // Predicated region
            $region85: #{deepgemm_linear.1} parent=83 // pred_check
              _
            $region86: #{deepgemm_linear.1} parent=83 // pred_check_branch
              %1451 = sbr.rel target = $region88
            $region87: #{deepgemm_linear.1} parent=83 // pred_region
              // Predicated region
              $region100: #{deepgemm_linear.1} parent=87 // pred_check
                _
              $region101: #{deepgemm_linear.1} parent=87 // pred_check_branch
                %1469 = sbr.rel (0) target = $region103
              $region102: #{deepgemm_linear.1} parent=87 // pred_region
                loop: start=0, step=1, limit=1
                $region104: #{deepgemm_linear.1} parent=102 // loop_pre_header
                  _
                $region105: #{deepgemm_linear.1} parent=102 // loop_header
                  %s1471 = sphi 0, %s1475
                  %p1472 = scmp.ge.s32.totalorder %s1471, 1
                  %s1476 = sphi %s1439, %s1439
                  %s1477 = sphi %s1447, %s1447
                $region106: #{deepgemm_linear.1} parent=102 // loop_header_branch
                  %1474 = sbr.rel (%p1472) target = $region110
                $region107: #{deepgemm_linear.1} parent=102 // loop_body
                  _
                $region108: #{deepgemm_linear.1} parent=102 // loop_footer
                  %s1475 = sadd.s32 1, %s1471
                $region109: #{deepgemm_linear.1} parent=102 // loop_footer_branch
                  %1470 = sbr.rel target = $region105
                $region110: #{deepgemm_linear.1} parent=102 // loop_exit
                  _
                %s1479 = ssub.s32 16, 1
                loop: start=0, step=1, limit=1
                $region111: #{deepgemm_linear.1} parent=102 // loop_pre_header
                  _
                $region112: #{deepgemm_linear.1} parent=102 // loop_header
                  %s1481 = sphi 0, %s1485
                  %p1482 = scmp.ge.s32.totalorder %s1481, 1
                  %s1486 = sphi %s1439, %s1439
                  %s1487 = sphi %s1447, %s1447
                $region113: #{deepgemm_linear.1} parent=102 // loop_header_branch
                  %1484 = sbr.rel (%p1482) target = $region117
                $region114: #{deepgemm_linear.1} parent=102 // loop_body
                  %v1488 = vld [vmem:[%s1486] sm:%s1479]
                  %1489 = vst [vmem:[%s1487] sm:%s1479] %v1488
                  %v1490 = vld [vmem:[%s1486 + $0x4] sm:%s1479]
                  %1491 = vst [vmem:[%s1487 + $0x8] sm:%s1479] %v1490
                $region115: #{deepgemm_linear.1} parent=102 // loop_footer
                  %s1485 = sadd.s32 1, %s1481
                $region116: #{deepgemm_linear.1} parent=102 // loop_footer_branch
                  %1480 = sbr.rel target = $region112
                $region117: #{deepgemm_linear.1} parent=102 // loop_exit
                  _
              $region103: #{deepgemm_linear.1} parent=87 // pred_fallthru
                _
            $region88: #{deepgemm_linear.1} parent=83 // pred_fallthru
              _
            // Predicated region
            $region89: #{deepgemm_linear.1} parent=83 // pred_check
              _
            $region90: #{deepgemm_linear.1} parent=83 // pred_check_branch
              %1453 = sbr.rel (0) target = $region92
            $region91: #{deepgemm_linear.1} parent=83 // pred_region
              %s1455 = ssub.s32 16, 1
              loop: start=0, step=1, limit=1
              $region93: #{deepgemm_linear.1} parent=91 // loop_pre_header
                _
              $region94: #{deepgemm_linear.1} parent=91 // loop_header
                %s1457 = sphi 0, %s1461
                %p1458 = scmp.ge.s32.totalorder %s1457, 1
                %s1462 = sphi %s1439, %s1439
                %s1463 = sphi %s1447, %s1447
              $region95: #{deepgemm_linear.1} parent=91 // loop_header_branch
                %1460 = sbr.rel (%p1458) target = $region99
              $region96: #{deepgemm_linear.1} parent=91 // loop_body
                %v1464 = vld [vmem:[%s1462] sm:%s1455]
                %1465 = vst [vmem:[%s1463] sm:%s1455] %v1464
                %v1466 = vld [vmem:[%s1462 + $0x4] sm:%s1455]
                %1467 = vst [vmem:[%s1463 + $0x8] sm:%s1455] %v1466
              $region97: #{deepgemm_linear.1} parent=91 // loop_footer
                %s1461 = sadd.s32 1, %s1457
              $region98: #{deepgemm_linear.1} parent=91 // loop_footer_branch
                %1456 = sbr.rel target = $region94
              $region99: #{deepgemm_linear.1} parent=91 // loop_exit
                _
            $region92: #{deepgemm_linear.1} parent=83 // pred_fallthru
              _
          $region84: #{deepgemm_linear.1} parent=79 // pred_fallthru
            _
          %1492 = vnop
        $region80: #{deepgemm_linear.1} parent=31 // pred_fallthru
          _
      $region32: #{deepgemm_linear.1} parent=5 // pred_fallthru
        _
      %p1493 = scmp.le.s32.totalorder 2, %s19
      // Predicated region
      $region118: #{deepgemm_linear.1} parent=5 // pred_check
        %p1494 = pneg %p1493
      $region119: #{deepgemm_linear.1} parent=5 // pred_check_branch
        %1496 = sbr.rel (%p1494) target = $region121
      $region120: #{deepgemm_linear.1} parent=5 // pred_region
        %s1497 = ssub.s32 %s19, 2
        // Predicated region
        $region122: #{deepgemm_linear.1} parent=120 // pred_check
          %p1498 = pneg %p151
        $region123: #{deepgemm_linear.1} parent=120 // pred_check_branch
          %1500 = sbr.rel (%p1498) target = $region125
        $region124: #{deepgemm_linear.1} parent=120 // pred_region
          %s1501 = sand.u32 %s136, 1
          %s1502 = sand.u32 %s136, 1
          %s1503 = smul.addr %s1502, 8
          %s1504 = scalar_lea.vmem [#allocation7], %s1503
        $region125: #{deepgemm_linear.1} parent=120 // pred_fallthru
          _
      $region121: #{deepgemm_linear.1} parent=5 // pred_fallthru
        _
    $region6: #{deepgemm_linear.1} parent=1 // loop_footer
      %s23 = sadd.s32 1, %s19
    $region7: #{deepgemm_linear.1} parent=1 // loop_footer_branch
      %18 = sbr.rel target = $region3
    $region8: #{deepgemm_linear.1} parent=1 // loop_exit
      _
    %1505 = vsyncpa [#allocation6], 1
    %s1506 = scalar_lea.sflag [#allocation6], 1
    %1507 = vsyncpa %s1506, 1

</llo_original>
